<compile_context>
chip_gen: v5e
topology: v5e:2x2
jax: 0.10.0
libtpu: 0.0.40
codegen_flags: <defaults>
</compile_context>

<pallas_src>
import functools

import jax
import jax.numpy as jnp
from jax.experimental import pallas as pl
from jax.experimental.pallas import tpu as pltpu

_INV_SQRT2 = 0.7071067811865476  # 1/sqrt(2) as a Python constant


def _round_up(n, m):
    return ((n + m - 1) // m) * m


def _vmem_capacity_bytes():
    """Physical VMEM of the attached chip; conservative 64 MiB fallback."""
    try:
        return int(pltpu.get_tpu_info().vmem_capacity_bytes)
    except Exception:
        return 64 << 20


def _vmem_needed(block_b, E, P, x_item, o_item, weight_buffers):
    """Honest VMEM estimate for one grid step (weights + streams + temps)."""
    weights = weight_buffers * (E * P + P * P) * 2                      # bf16 W1/W2
    params = weight_buffers * 8 * _round_up(P, 128) * 4                 # (4,P)->(8,P) f32
    stream = 2 * block_b * E * x_item + 2 * block_b * P * o_item        # dbl-buffered x/out
    interm = 4 * block_b * P * 4                                        # h, g, y, centered
    return weights + params + stream + interm


def _pick_block_b(B, E, P, x_item, o_item, vmem_cap_hi, max_bb):
    """Batch tile: multiple of 8; >=2 tiles when B>8 (v7x megacore); VMEM-sized."""
    if B <= 8:
        return max(_round_up(B, 8), 8)
    bb = min(max_bb, _round_up(pl.cdiv(B, 2), 8))
    # Shrink (conservatively assuming double-buffered weights) until it fits.
    while bb > 8 and _vmem_needed(bb, E, P, x_item, o_item, 2) + (8 << 20) > vmem_cap_hi:
        bb = max(8, _round_up(bb // 2, 8))
    return bb


def _projection_head_kernel(x_ref, w1_ref, w2_ref, p_ref, o_ref, *, eps, gelu_dtype):
    # p_ref rows: 0=b1, 1=b2, 2=gamma, 3=beta (all f32, lane-dense).

    # h = x @ W1 + b1   (bf16 MXU operands, f32 accumulation)
    x_bf16 = x_ref[...].astype(jnp.bfloat16)
    h = jnp.dot(x_bf16, w1_ref[...], preferred_element_type=jnp.float32)
    h = h + p_ref[0:1, :]                                   # (TB,P) + (1,P)

    # GELU (exact erf form, matching nn.GELU() default).
    if gelu_dtype == jnp.bfloat16:
        # v6e/v7x option: erf polynomial in bf16 (2-per-lane VALU packing);
        # g feeds the second matmul in bf16 anyway.  h stays f32 for the
        # residual / LayerNorm.
        t = h.astype(jnp.bfloat16)
        g = (0.5 * t) * (1.0 + jax.lax.erf(t * _INV_SQRT2))
    else:
        g = (0.5 * h * (1.0 + jax.lax.erf(h * _INV_SQRT2))).astype(jnp.bfloat16)

    # y = g @ W2 + b2   (bf16 MXU operands, f32 accumulation)
    y = jnp.dot(g, w2_ref[...], preferred_element_type=jnp.float32)
    y = y + p_ref[1:2, :]

    # dropout (eval mode) -> identity; residual add
    # TODO(synk): training-mode dropout mask not emitted.
    y = y + h

    # LayerNorm over last dim (biased variance, eps inside rsqrt), all f32.
    mean = jnp.mean(y, axis=-1, keepdims=True)
    centered = y - mean
    var = jnp.mean(centered * centered, axis=-1, keepdims=True)
    inv = jax.lax.rsqrt(var + eps)
    out = centered * inv * p_ref[2:3, :] + p_ref[3:4, :]

    o_ref[...] = out.astype(o_ref.dtype)


def projection_head(x, w1, b1, w2, b2, gamma, beta, *, eps=1e-5,
                    block_b=None, gelu_dtype=jnp.float32):
    """x: (B, E) f32 or bf16.  w1: (E, P), w2: (P, P).  Returns (B, P) in x.dtype."""
    B, E = x.shape
    P = w1.shape[1]
    if P % 128 != 0:
        raise ValueError(
            f"projection_dim P={P} must be a multiple of 128 for lane-dense "
            "output tiles (pad the projection weights/params).")

    x_item = jnp.dtype(x.dtype).itemsize
    o_item = x_item  # output dtype follows input dtype

    cap = _vmem_capacity_bytes()
    cap_hi = cap - max(16 << 20, cap // 4)   # 64 MiB -> 48 MiB, 128 MiB -> 96 MiB

    kind = ""
    try:
        kind = jax.devices()[0].device_kind.lower()
    except Exception:
        pass
    max_bb = 1024 if ("v6" in kind or "v7" in kind) else 512

    if block_b is None:
        block_b = _pick_block_b(B, E, P, x_item, o_item, cap_hi, max_bb)
    n_tiles = pl.cdiv(B, block_b)

    # Weights cast once to bf16 (native MXU dtype, half the resident bytes).
    w1_bf16 = w1.astype(jnp.bfloat16)
    w2_bf16 = w2.astype(jnp.bfloat16)
    # b1 / b2 / gamma / beta packed into one (4, P) f32 tile -> one DMA/buffer.
    params = jnp.stack([b1, b2, gamma, beta]).astype(jnp.float32)

    cost = pl.CostEstimate(
        flops=2 * B * E * P + 2 * B * P * P,
        transcendentals=B * P,
        bytes_accessed=(B * E * x_item + B * P * o_item
                        + (E * P + P * P) * 2 + 4 * P * 4))

    kernel = functools.partial(_projection_head_kernel, eps=eps,
                               gelu_dtype=gelu_dtype)

    def call(single_buffer_consts):
        pm = ({"pipeline_mode": pl.Buffered(1)} if single_buffer_consts else {})
        wfac = 1 if single_buffer_consts else 2
        vmem_limit = int(min(
            max(_vmem_needed(block_b, E, P, x_item, o_item, wfac) + (8 << 20),
                32 << 20),
            cap_hi))
        return pl.pallas_call(
            kernel,
            out_shape=jax.ShapeDtypeStruct((B, P), x.dtype),
            grid_spec=pltpu.PrefetchScalarGridSpec(
                num_scalar_prefetch=0,
                grid=(n_tiles,),
                in_specs=[
                    pl.BlockSpec((block_b, E), lambda i: (i, 0)),   # x (batch-tiled)
                    pl.BlockSpec((E, P), lambda i: (0, 0), **pm),   # W1 (resident)
                    pl.BlockSpec((P, P), lambda i: (0, 0), **pm),   # W2 (resident)
                    pl.BlockSpec((4, P), lambda i: (0, 0), **pm),   # b1/b2/gamma/beta
                ],
                out_specs=pl.BlockSpec((block_b, P), lambda i: (i, 0)),
            ),
            compiler_params=pltpu.CompilerParams(
                dimension_semantics=("parallel",),    # v7x megacore split
                vmem_limit_bytes=vmem_limit),
            cost_estimate=cost,
        )(x, w1_bf16, w2_bf16, params)

    try:
        return call(True)
    except Exception:
        # TODO(synk): this jax build rejected pl.Buffered(1) single-buffering of
        # the constant-index weights; fall back to default double-buffering.
        return call(False)


def _reference_f32(x, w1, b1, w2, b2, gamma, beta, eps=1e-5):
    h = x @ w1 + b1
    g = 0.5 * h * (1.0 + jax.lax.erf(h * _INV_SQRT2))
    y = g @ w2 + b2
    y = y + h
    mean = jnp.mean(y, axis=-1, keepdims=True)
    var = jnp.mean((y - mean) ** 2, axis=-1, keepdims=True)
    return (y - mean) * jax.lax.rsqrt(var + eps) * gamma + beta


def _reference_bf16(x, w1, b1, w2, b2, gamma, beta, eps=1e-5):
    # Same bf16-operand / f32-accumulate arithmetic as the kernel (f32 GELU path).
    h = jnp.dot(x.astype(jnp.bfloat16), w1.astype(jnp.bfloat16),
                preferred_element_type=jnp.float32) + b1
    g = 0.5 * h * (1.0 + jax.lax.erf(h * _INV_SQRT2))
    y = jnp.dot(g.astype(jnp.bfloat16), w2.astype(jnp.bfloat16),
                preferred_element_type=jnp.float32) + b2
    y = y + h
    mean = jnp.mean(y, axis=-1, keepdims=True)
    var = jnp.mean((y - mean) ** 2, axis=-1, keepdims=True)
    return (y - mean) * jax.lax.rsqrt(var + eps) * gamma + beta


if __name__ == "__main__":
    B = 16                # small batch -> block_b=8, 2 grid tiles
    E = 32                # embedding_dim
    P = 256               # projection_dim (module default)

    key = jax.random.PRNGKey(0)
    kx, k1, k2, k3, k4 = jax.random.split(key, 5)

    x = jax.random.normal(kx, (B, E), dtype=jnp.float32)

    # Deterministic parameter init (shapes per nn.Linear / nn.LayerNorm)
    w1 = jax.random.normal(k1, (E, P), dtype=jnp.float32) * 0.02
    b1 = jax.random.normal(k2, (P,), dtype=jnp.float32) * 0.02
    w2 = jax.random.normal(k3, (P, P), dtype=jnp.float32) * 0.02
    b2 = jax.random.normal(k4, (P,), dtype=jnp.float32) * 0.02
    gamma = jnp.ones((P,), dtype=jnp.float32)
    beta = jnp.zeros((P,), dtype=jnp.float32)

    out = projection_head(x, w1, b1, w2, b2, gamma, beta)
    out = jax.block_until_ready(out)
    assert out.shape == (B, P), out.shape

    # Tight check against a reference using the same bf16-in / f32-acc dots.
    ref_bf16 = _reference_bf16(x, w1, b1, w2, b2, gamma, beta)
    assert jnp.allclose(out, ref_bf16, atol=1e-3, rtol=1e-3), float(
        jnp.max(jnp.abs(out - ref_bf16)))

    # Looser check against the full-f32 PyTorch-equivalent reference
    # (bf16 matmul operands drift at ~1e-3 relative level -- intentional).
    ref_f32 = _reference_f32(x, w1, b1, w2, b2, gamma, beta)
    assert jnp.allclose(out, ref_f32, atol=3e-2, rtol=3e-2), float(
        jnp.max(jnp.abs(out - ref_f32)))

    print("KERNEL_OK")
</pallas_src>

<mosaic_0001>
module attributes {stable_mosaic.version = 11 : i64} {
  func.func @_projection_head_kernel(%arg0: i32, %arg1: memref<8x32xf32, #tpu.memory_space<vmem>>, %arg2: memref<32x256xbf16, #tpu.memory_space<vmem>>, %arg3: memref<256x256xbf16, #tpu.memory_space<vmem>>, %arg4: memref<4x256xf32, #tpu.memory_space<vmem>>, %arg5: memref<8x256xf32, #tpu.memory_space<vmem>>) attributes {dimension_semantics = [#tpu.dimension_semantics<parallel>], iteration_bounds = array<i64: 2>, scalar_prefetch = 0 : i64, scratch_operands = 0 : i64, tpu.core_type = #tpu.core_type<tc>, window_params = [{transform_indices = @transform_0, window_bounds = array<i64: 8, 32>}, {pipeline_mode = #tpu.pipeline_mode<synchronous>, transform_indices = @transform_1, window_bounds = array<i64: 32, 256>}, {pipeline_mode = #tpu.pipeline_mode<synchronous>, transform_indices = @transform_2, window_bounds = array<i64: 256, 256>}, {pipeline_mode = #tpu.pipeline_mode<synchronous>, transform_indices = @transform_3, window_bounds = array<i64: 4, 256>}, {transform_indices = @transform_4, window_bounds = array<i64: 8, 256>}]} {
    %c0 = arith.constant 0 : index
    %c0_0 = arith.constant 0 : index
    %0 = vector.load %arg1[%c0, %c0_0] : memref<8x32xf32, #tpu.memory_space<vmem>>, vector<8x32xf32>
    %1 = arith.truncf %0 : vector<8x32xf32> to vector<8x32xbf16>
    %c0_1 = arith.constant 0 : index
    %c0_2 = arith.constant 0 : index
    %2 = vector.load %arg2[%c0_1, %c0_2] : memref<32x256xbf16, #tpu.memory_space<vmem>>, vector<32x256xbf16>
    %cst = arith.constant dense<0.000000e+00> : vector<8x256xf32>
    %3 = tpu.matmul %1, %2, %cst {dimension_numbers = #tpu.dot_dimension_numbers<[1], [0], [0], [1], [0, 0, 1, 1], [], []>} : vector<8x32xbf16>, vector<32x256xbf16>, vector<8x256xf32> -> vector<8x256xf32>
    %c0_3 = arith.constant 0 : index
    %c0_4 = arith.constant 0 : index
    %4 = vector.load %arg4[%c0_3, %c0_4] : memref<4x256xf32, #tpu.memory_space<vmem>>, vector<1x256xf32>
    %5 = vector.broadcast %4 : vector<1x256xf32> to vector<8x256xf32>
    %6 = arith.addf %3, %5 : vector<8x256xf32>
    %cst_5 = arith.constant 5.000000e-01 : f32
    %7 = vector.broadcast %cst_5 : f32 to vector<8x256xf32>
    %8 = arith.mulf %7, %6 : vector<8x256xf32>
    %cst_6 = arith.constant 0.707106769 : f32
    %9 = vector.broadcast %cst_6 : f32 to vector<8x256xf32>
    %10 = arith.mulf %6, %9 : vector<8x256xf32>
    %11 = math.erf %10 : vector<8x256xf32>
    %cst_7 = arith.constant 1.000000e+00 : f32
    %12 = vector.broadcast %cst_7 : f32 to vector<8x256xf32>
    %13 = arith.addf %12, %11 : vector<8x256xf32>
    %14 = arith.mulf %8, %13 : vector<8x256xf32>
    %15 = arith.truncf %14 : vector<8x256xf32> to vector<8x256xbf16>
    %c0_8 = arith.constant 0 : index
    %c0_9 = arith.constant 0 : index
    %16 = vector.load %arg3[%c0_8, %c0_9] : memref<256x256xbf16, #tpu.memory_space<vmem>>, vector<256x256xbf16>
    %cst_10 = arith.constant dense<0.000000e+00> : vector<8x256xf32>
    %17 = tpu.matmul %15, %16, %cst_10 {dimension_numbers = #tpu.dot_dimension_numbers<[1], [0], [0], [1], [0, 0, 1, 1], [], []>} : vector<8x256xbf16>, vector<256x256xbf16>, vector<8x256xf32> -> vector<8x256xf32>
    %c1 = arith.constant 1 : index
    %c0_11 = arith.constant 0 : index
    %18 = vector.load %arg4[%c1, %c0_11] : memref<4x256xf32, #tpu.memory_space<vmem>>, vector<1x256xf32>
    %19 = vector.broadcast %18 : vector<1x256xf32> to vector<8x256xf32>
    %20 = arith.addf %17, %19 : vector<8x256xf32>
    %21 = arith.addf %20, %6 : vector<8x256xf32>
    %cst_12 = arith.constant dense<0.000000e+00> : vector<8xf32>
    %22 = vector.multi_reduction <add>, %21, %cst_12 [1] : vector<8x256xf32> to vector<8xf32>
    %23 = vector.shape_cast %22 : vector<8xf32> to vector<8x1xf32>
    %cst_13 = arith.constant 2.560000e+02 : f32
    %24 = vector.broadcast %cst_13 : f32 to vector<8x1xf32>
    %25 = arith.divf %23, %24 : vector<8x1xf32>
    %26 = vector.broadcast %25 : vector<8x1xf32> to vector<8x256xf32>
    %27 = arith.subf %21, %26 : vector<8x256xf32>
    %28 = arith.mulf %27, %27 : vector<8x256xf32>
    %cst_14 = arith.constant dense<0.000000e+00> : vector<8xf32>
    %29 = vector.multi_reduction <add>, %28, %cst_14 [1] : vector<8x256xf32> to vector<8xf32>
    %30 = vector.shape_cast %29 : vector<8xf32> to vector<8x1xf32>
    %cst_15 = arith.constant 2.560000e+02 : f32
    %31 = vector.broadcast %cst_15 : f32 to vector<8x1xf32>
    %32 = arith.divf %30, %31 : vector<8x1xf32>
    %cst_16 = arith.constant 9.99999974E-6 : f32
    %33 = vector.broadcast %cst_16 : f32 to vector<8x1xf32>
    %34 = arith.addf %32, %33 : vector<8x1xf32>
    %35 = math.rsqrt %34 : vector<8x1xf32>
    %36 = vector.broadcast %35 : vector<8x1xf32> to vector<8x256xf32>
    %37 = arith.mulf %27, %36 : vector<8x256xf32>
    %c2 = arith.constant 2 : index
    %c0_17 = arith.constant 0 : index
    %38 = vector.load %arg4[%c2, %c0_17] : memref<4x256xf32, #tpu.memory_space<vmem>>, vector<1x256xf32>
    %39 = vector.broadcast %38 : vector<1x256xf32> to vector<8x256xf32>
    %40 = arith.mulf %37, %39 : vector<8x256xf32>
    %c3 = arith.constant 3 : index
    %c0_18 = arith.constant 0 : index
    %41 = vector.load %arg4[%c3, %c0_18] : memref<4x256xf32, #tpu.memory_space<vmem>>, vector<1x256xf32>
    %42 = vector.broadcast %41 : vector<1x256xf32> to vector<8x256xf32>
    %43 = arith.addf %40, %42 : vector<8x256xf32>
    %c0_19 = arith.constant 0 : index
    %c0_20 = arith.constant 0 : index
    %44 = vector.load %arg5[%c0_19, %c0_20] : memref<8x256xf32, #tpu.memory_space<vmem>>, vector<8x256xf32>
    tpu.vector_store %arg5[%c0_19, %c0_20], %43 {strides = array<i32>} : memref<8x256xf32, #tpu.memory_space<vmem>>, vector<8x256xf32>,
    return
  }
  func.func @transform_0(%arg0: i32) -> (i32, i32) {
    %c0_i32 = arith.constant 0 : i32
    %c0_i32_0 = arith.constant 0 : i32
    return %arg0, %c0_i32 : i32, i32
  }
  func.func @transform_1(%arg0: i32) -> (i32, i32) {
    %c0_i32 = arith.constant 0 : i32
    %c0_i32_0 = arith.constant 0 : i32
    %c0_i32_1 = arith.constant 0 : i32
    return %c0_i32, %c0_i32_0 : i32, i32
  }
  func.func @transform_2(%arg0: i32) -> (i32, i32) {
    %c0_i32 = arith.constant 0 : i32
    %c0_i32_0 = arith.constant 0 : i32
    %c0_i32_1 = arith.constant 0 : i32
    return %c0_i32, %c0_i32_0 : i32, i32
  }
  func.func @transform_3(%arg0: i32) -> (i32, i32) {
    %c0_i32 = arith.constant 0 : i32
    %c0_i32_0 = arith.constant 0 : i32
    %c0_i32_1 = arith.constant 0 : i32
    return %c0_i32, %c0_i32_0 : i32, i32
  }
  func.func @transform_4(%arg0: i32) -> (i32, i32) {
    %c0_i32 = arith.constant 0 : i32
    %c0_i32_0 = arith.constant 0 : i32
    return %arg0, %c0_i32 : i32, i32
  }
}

module attributes {stable_mosaic.version = 11 : i64} {
  func.func @_projection_head_kernel(%arg0: i32, %arg1: memref<8x32xf32, #tpu.memory_space<vmem>>, %arg2: memref<32x256xbf16, #tpu.memory_space<vmem>>, %arg3: memref<256x256xbf16, #tpu.memory_space<vmem>>, %arg4: memref<4x256xf32, #tpu.memory_space<vmem>>, %arg5: memref<8x256xf32, #tpu.memory_space<vmem>>) attributes {dimension_semantics = [#tpu.dimension_semantics<parallel>], iteration_bounds = array<i64: 2>, scalar_prefetch = 0 : i64, scratch_operands = 0 : i64, tpu.core_type = #tpu.core_type<tc>, window_params = [{transform_indices = @transform_0, window_bounds = array<i64: 8, 32>}, {pipeline_mode = #tpu.pipeline_mode<synchronous>, transform_indices = @transform_1, window_bounds = array<i64: 32, 256>}, {pipeline_mode = #tpu.pipeline_mode<synchronous>, transform_indices = @transform_2, window_bounds = array<i64: 256, 256>}, {pipeline_mode = #tpu.pipeline_mode<synchronous>, transform_indices = @transform_3, window_bounds = array<i64: 4, 256>}, {transform_indices = @transform_4, window_bounds = array<i64: 8, 256>}]} {
    %c0 = arith.constant 0 : index
    %c0_0 = arith.constant 0 : index
    %0 = vector.load %arg1[%c0, %c0_0] : memref<8x32xf32, #tpu.memory_space<vmem>>, vector<8x32xf32>
    %1 = arith.truncf %0 : vector<8x32xf32> to vector<8x32xbf16>
    %c0_1 = arith.constant 0 : index
    %c0_2 = arith.constant 0 : index
    %2 = vector.load %arg2[%c0_1, %c0_2] : memref<32x256xbf16, #tpu.memory_space<vmem>>, vector<32x256xbf16>
    %cst = arith.constant dense<0.000000e+00> : vector<8x256xf32>
    %3 = tpu.matmul %1, %2, %cst {dimension_numbers = #tpu.dot_dimension_numbers<[1], [0], [0], [1], [0, 0, 1, 1], [], []>} : vector<8x32xbf16>, vector<32x256xbf16>, vector<8x256xf32> -> vector<8x256xf32>
    %c0_3 = arith.constant 0 : index
    %c0_4 = arith.constant 0 : index
    %4 = vector.load %arg4[%c0_3, %c0_4] : memref<4x256xf32, #tpu.memory_space<vmem>>, vector<1x256xf32>
    %5 = vector.broadcast %4 : vector<1x256xf32> to vector<8x256xf32>
    %6 = arith.addf %3, %5 : vector<8x256xf32>
    %cst_5 = arith.constant 5.000000e-01 : f32
    %7 = vector.broadcast %cst_5 : f32 to vector<8x256xf32>
    %8 = arith.mulf %7, %6 : vector<8x256xf32>
    %cst_6 = arith.constant 0.707106769 : f32
    %9 = vector.broadcast %cst_6 : f32 to vector<8x256xf32>
    %10 = arith.mulf %6, %9 : vector<8x256xf32>
    %11 = math.erf %10 : vector<8x256xf32>
    %cst_7 = arith.constant 1.000000e+00 : f32
    %12 = vector.broadcast %cst_7 : f32 to vector<8x256xf32>
    %13 = arith.addf %12, %11 : vector<8x256xf32>
    %14 = arith.mulf %8, %13 : vector<8x256xf32>
    %15 = arith.truncf %14 : vector<8x256xf32> to vector<8x256xbf16>
    %c0_8 = arith.constant 0 : index
    %c0_9 = arith.constant 0 : index
    %16 = vector.load %arg3[%c0_8, %c0_9] : memref<256x256xbf16, #tpu.memory_space<vmem>>, vector<256x256xbf16>
    %cst_10 = arith.constant dense<0.000000e+00> : vector<8x256xf32>
    %17 = tpu.matmul %15, %16, %cst_10 {dimension_numbers = #tpu.dot_dimension_numbers<[1], [0], [0], [1], [0, 0, 1, 1], [], []>} : vector<8x256xbf16>, vector<256x256xbf16>, vector<8x256xf32> -> vector<8x256xf32>
    %c1 = arith.constant 1 : index
    %c0_11 = arith.constant 0 : index
    %18 = vector.load %arg4[%c1, %c0_11] : memref<4x256xf32, #tpu.memory_space<vmem>>, vector<1x256xf32>
    %19 = vector.broadcast %18 : vector<1x256xf32> to vector<8x256xf32>
    %20 = arith.addf %17, %19 : vector<8x256xf32>
    %21 = arith.addf %20, %6 : vector<8x256xf32>
    %cst_12 = arith.constant dense<0.000000e+00> : vector<8xf32>
    %22 = vector.multi_reduction <add>, %21, %cst_12 [1] : vector<8x256xf32> to vector<8xf32>
    %23 = vector.shape_cast %22 : vector<8xf32> to vector<8x1xf32>
    %cst_13 = arith.constant 2.560000e+02 : f32
    %24 = vector.broadcast %cst_13 : f32 to vector<8x1xf32>
    %25 = arith.divf %23, %24 : vector<8x1xf32>
    %26 = vector.broadcast %25 : vector<8x1xf32> to vector<8x256xf32>
    %27 = arith.subf %21, %26 : vector<8x256xf32>
    %28 = arith.mulf %27, %27 : vector<8x256xf32>
    %cst_14 = arith.constant dense<0.000000e+00> : vector<8xf32>
    %29 = vector.multi_reduction <add>, %28, %cst_14 [1] : vector<8x256xf32> to vector<8xf32>
    %30 = vector.shape_cast %29 : vector<8xf32> to vector<8x1xf32>
    %cst_15 = arith.constant 2.560000e+02 : f32
    %31 = vector.broadcast %cst_15 : f32 to vector<8x1xf32>
    %32 = arith.divf %30, %31 : vector<8x1xf32>
    %cst_16 = arith.constant 9.99999974E-6 : f32
    %33 = vector.broadcast %cst_16 : f32 to vector<8x1xf32>
    %34 = arith.addf %32, %33 : vector<8x1xf32>
    %35 = math.rsqrt %34 : vector<8x1xf32>
    %36 = vector.broadcast %35 : vector<8x1xf32> to vector<8x256xf32>
    %37 = arith.mulf %27, %36 : vector<8x256xf32>
    %c2 = arith.constant 2 : index
    %c0_17 = arith.constant 0 : index
    %38 = vector.load %arg4[%c2, %c0_17] : memref<4x256xf32, #tpu.memory_space<vmem>>, vector<1x256xf32>
    %39 = vector.broadcast %38 : vector<1x256xf32> to vector<8x256xf32>
    %40 = arith.mulf %37, %39 : vector<8x256xf32>
    %c3 = arith.constant 3 : index
    %c0_18 = arith.constant 0 : index
    %41 = vector.load %arg4[%c3, %c0_18] : memref<4x256xf32, #tpu.memory_space<vmem>>, vector<1x256xf32>
    %42 = vector.broadcast %41 : vector<1x256xf32> to vector<8x256xf32>
    %43 = arith.addf %40, %42 : vector<8x256xf32>
    %c0_19 = arith.constant 0 : index
    %c0_20 = arith.constant 0 : index
    %44 = vector.load %arg5[%c0_19, %c0_20] : memref<8x256xf32, #tpu.memory_space<vmem>>, vector<8x256xf32>
    tpu.vector_store %arg5[%c0_19, %c0_20], %43 {strides = array<i32>} : memref<8x256xf32, #tpu.memory_space<vmem>>, vector<8x256xf32>,
    return
  }
  func.func @transform_0(%arg0: i32) -> (i32, i32) {
    %c0_i32 = arith.constant 0 : i32
    %c0_i32_0 = arith.constant 0 : i32
    return %arg0, %c0_i32 : i32, i32
  }
  func.func @transform_1(%arg0: i32) -> (i32, i32) {
    %c0_i32 = arith.constant 0 : i32
    %c0_i32_0 = arith.constant 0 : i32
    %c0_i32_1 = arith.constant 0 : i32
    return %c0_i32, %c0_i32_0 : i32, i32
  }
  func.func @transform_2(%arg0: i32) -> (i32, i32) {
    %c0_i32 = arith.constant 0 : i32
    %c0_i32_0 = arith.constant 0 : i32
    %c0_i32_1 = arith.constant 0 : i32
    return %c0_i32, %c0_i32_0 : i32, i32
  }
  func.func @transform_3(%arg0: i32) -> (i32, i32) {
    %c0_i32 = arith.constant 0 : i32
    %c0_i32_0 = arith.constant 0 : i32
    %c0_i32_1 = arith.constant 0 : i32
    return %c0_i32, %c0_i32_0 : i32, i32
  }
  func.func @transform_4(%arg0: i32) -> (i32, i32) {
    %c0_i32 = arith.constant 0 : i32
    %c0_i32_0 = arith.constant 0 : i32
    return %arg0, %c0_i32 : i32, i32
  }
}

</mosaic_0001>

<llo_original>
// kernel: tpu_custom_call.1
$region0: #{tpu_custom_call.1}
  #allocation0 [shape = 'u32[]', space=smem, size = 0x4, offset = 0x4, fixed_abs, tag = 'smem constant byte address 0x4 - core index']
  #allocation1 [shape = 'u32[72,128]{1,0:T(1,128)}', space=vmem, size = 0x9000, scoped, tag = 'internal scratch']
  %s0 = inlined_call_operand.hbm [shape: f32[16,32], index: 0, kind: input, shape index: {}]
  %s1 = inlined_call_operand.hbm [shape: bf16[32,256], index: 1, kind: input, shape index: {}]
  %s2 = inlined_call_operand.hbm [shape: bf16[256,256], index: 2, kind: input, shape index: {}]
  %s3 = inlined_call_operand.hbm [shape: f32[4,256], index: 3, kind: input, shape index: {}]
  %s4 = inlined_call_operand.hbm [shape: f32[16,256], index: 4, kind: output, shape index: {}]
  %s5 = sld [smem:[#allocation0]]
  $region65: #{tpu_custom_call.1} parent=0
    _
  %s7 = ssub.s32 1, %s5
  %s8 = scalar_select 0, %s7, %s5
  $region1: #{tpu_custom_call.1} parent=0
    #allocation2 [shape = 'u8[8192]{0}', space=vmem, size = 0x2000, scoped, tag = 'input window, operand 0']
    #allocation3 [shape = 's32[2]{0}', space=sflag, size = 0x8, scoped, tag = 'scoped memory for tpu_custom_call.1']
    #allocation4 [shape = 's32[2]{0}', space=sflag, size = 0x8, scoped, tag = 'scoped memory for tpu_custom_call.1']
    #allocation5 [shape = 'u8[16384]{0}', space=vmem, size = 0x4000, scoped, tag = 'input window, operand 1, single buffered']
    #allocation6 [shape = 's32[1]{0}', space=sflag, size = 0x4, scoped, tag = 'scoped memory for tpu_custom_call.1']
    #allocation7 [shape = 'u8[131072]{0}', space=vmem, size = 0x20000, scoped, tag = 'input window, operand 2, single buffered']
    #allocation8 [shape = 'u8[4096]{0}', space=vmem, size = 0x1000, scoped, tag = 'input window, operand 3, single buffered']
    #allocation9 [shape = 's32[1]{0}', space=sflag, size = 0x4, scoped, tag = 'scoped memory for tpu_custom_call.1']
    #allocation10 [shape = 'u8[16384]{0}', space=vmem, size = 0x4000, scoped, tag = 'output window, operand 0']
    %9 = vsyncpa [#allocation3], 0
    %s10 = scalar_lea.sflag [#allocation3], 1
    %11 = vsyncpa %s10, 0
    %12 = vsyncpa [#allocation6], 0
    %13 = vsyncpa [#allocation9], 0
    %14 = vsyncpa [#allocation4], 0
    %s15 = scalar_lea.sflag [#allocation4], 1
    %16 = vsyncpa %s15, 0
    loop: start=0, step=1, limit=4
    $region2: #{tpu_custom_call.1} parent=1 // loop_pre_header
      _
    $region3: #{tpu_custom_call.1} parent=1 // loop_header
      %s18 = sphi 0, %s22
      %p19 = scmp.ge.s32.totalorder %s18, 4
      %s28 = sphi 0, %s30
      %s31 = sphi 0, %s28
      %s32 = sphi 0, %s31
      %s48 = sphi 0, %s32
      %s52 = sphi 0, %s52
      %s54 = sphi 0, %s52
      %s55 = sphi 0, %s54
      %s69 = sphi 0, %s55
      %s73 = sphi 0, %s73
      %s75 = sphi 0, %s73
      %s76 = sphi 0, %s75
      %s90 = sphi 0, %s76
      %s94 = sphi 0, %s94
      %s96 = sphi 0, %s94
      %s97 = sphi 0, %s96
      %s111 = sphi 0, %s97
      %s117 = sphi 0, %s119
      %s120 = sphi 0, %s117
      %s121 = sphi 0, %s120
      %s137 = sphi 0, %s121
    $region4: #{tpu_custom_call.1} parent=1 // loop_header_branch
      %21 = sbr.rel (%p19) target = $region8
    $region5: #{tpu_custom_call.1} parent=1 // loop_body
      %s23 = ssub.s32 %s18, 1
      %s24 = ssub.s32 %s18, 2
      %s25 = sadd.s32 %s18, 1
      %s26 = ssub.s32 %s18, %s25
      %p27 = scmp.eq.s32.totalorder %s26, 0
      %s29 = sadd.s32 %s28, 1
      %s30 = scalar_select %p27, %s28, %s29
      %p33 = pneg %p27
      %p34 = scmp.eq.s32.totalorder %s18, 1
      %p35 = por %p33, %p34
      %p36 = scmp.ne.s32.totalorder %s28, %s31
      %p37 = scmp.eq.s32.totalorder %s18, 0
      %p38 = por %p36, %p37
      %p39 = scmp.ne.s32.totalorder %s28, %s31
      %p40 = scmp.eq.s32.totalorder %s23, 1
      %p41 = por %p39, %p40
      %p42 = scmp.ne.s32.totalorder %s31, %s32
      %p43 = scmp.eq.s32.totalorder %s23, 0
      %p44 = por %p42, %p43
      %p45 = scmp.ne.s32.totalorder %s31, %s32
      %p46 = scmp.eq.s32.totalorder %s24, 1
      %p47 = por %p45, %p46
      %p49 = scmp.ne.s32.totalorder %s32, %s48
      %p50 = scmp.eq.s32.totalorder %s24, 0
      %p51 = por %p49, %p50
      %s53 = sadd.s32 %s52, 1
      %p56 = scmp.eq.s32.totalorder %s18, 1
      %p57 = scmp.ne.s32.totalorder %s52, %s54
      %p58 = scmp.eq.s32.totalorder %s18, 0
      %p59 = por %p57, %p58
      %p60 = scmp.ne.s32.totalorder %s52, %s54
      %p61 = scmp.eq.s32.totalorder %s23, 1
      %p62 = por %p60, %p61
      %p63 = scmp.ne.s32.totalorder %s54, %s55
      %p64 = scmp.eq.s32.totalorder %s23, 0
      %p65 = por %p63, %p64
      %p66 = scmp.ne.s32.totalorder %s54, %s55
      %p67 = scmp.eq.s32.totalorder %s24, 1
      %p68 = por %p66, %p67
      %p70 = scmp.ne.s32.totalorder %s55, %s69
      %p71 = scmp.eq.s32.totalorder %s24, 0
      %p72 = por %p70, %p71
      %s74 = sadd.s32 %s73, 1
      %p77 = scmp.eq.s32.totalorder %s18, 1
      %p78 = scmp.ne.s32.totalorder %s73, %s75
      %p79 = scmp.eq.s32.totalorder %s18, 0
      %p80 = por %p78, %p79
      %p81 = scmp.ne.s32.totalorder %s73, %s75
      %p82 = scmp.eq.s32.totalorder %s23, 1
      %p83 = por %p81, %p82
      %p84 = scmp.ne.s32.totalorder %s75, %s76
      %p85 = scmp.eq.s32.totalorder %s23, 0
      %p86 = por %p84, %p85
      %p87 = scmp.ne.s32.totalorder %s75, %s76
      %p88 = scmp.eq.s32.totalorder %s24, 1
      %p89 = por %p87, %p88
      %p91 = scmp.ne.s32.totalorder %s76, %s90
      %p92 = scmp.eq.s32.totalorder %s24, 0
      %p93 = por %p91, %p92
      %s95 = sadd.s32 %s94, 1
      %p98 = scmp.eq.s32.totalorder %s18, 1
      %p99 = scmp.ne.s32.totalorder %s94, %s96
      %p100 = scmp.eq.s32.totalorder %s18, 0
      %p101 = por %p99, %p100
      %p102 = scmp.ne.s32.totalorder %s94, %s96
      %p103 = scmp.eq.s32.totalorder %s23, 1
      %p104 = por %p102, %p103
      %p105 = scmp.ne.s32.totalorder %s96, %s97
      %p106 = scmp.eq.s32.totalorder %s23, 0
      %p107 = por %p105, %p106
      %p108 = scmp.ne.s32.totalorder %s96, %s97
      %p109 = scmp.eq.s32.totalorder %s24, 1
      %p110 = por %p108, %p109
      %p112 = scmp.ne.s32.totalorder %s97, %s111
      %p113 = scmp.eq.s32.totalorder %s24, 0
      %p114 = por %p112, %p113
      %s115 = ssub.s32 %s18, %s25
      %p116 = scmp.eq.s32.totalorder %s115, 0
      %s118 = sadd.s32 %s117, 1
      %s119 = scalar_select %p116, %s117, %s118
      %p122 = pneg %p116
      %p123 = scmp.eq.s32.totalorder %s18, 1
      %p124 = por %p122, %p123
      %p125 = scmp.ne.s32.totalorder %s117, %s120
      %p126 = scmp.eq.s32.totalorder %s18, 0
      %p127 = por %p125, %p126
      %p128 = scmp.ne.s32.totalorder %s117, %s120
      %p129 = scmp.eq.s32.totalorder %s23, 1
      %p130 = por %p128, %p129
      %p131 = scmp.ne.s32.totalorder %s120, %s121
      %p132 = scmp.eq.s32.totalorder %s23, 0
      %p133 = por %p131, %p132
      %p134 = scmp.ne.s32.totalorder %s120, %s121
      %p135 = scmp.eq.s32.totalorder %s24, 1
      %p136 = por %p134, %p135
      %p138 = scmp.ne.s32.totalorder %s121, %s137
      %p139 = scmp.eq.s32.totalorder %s24, 0
      %p140 = por %p138, %p139
      %p141 = scmp.le.s32.totalorder 1, %s18
      %p142 = scmp.lt.s32.totalorder %s18, 3
      %p143 = pnand %p141, %p142
      %p144 = pneg %p143
      // Predicated region
      $region9: #{tpu_custom_call.1} parent=5 // pred_check
        _
      $region10: #{tpu_custom_call.1} parent=5 // pred_check_branch
        %146 = sbr.rel (%p143) target = $region12
      $region11: #{tpu_custom_call.1} parent=5 // pred_region
        %s147 = ssub.s32 %s18, 1
        // Predicated region
        $region13: #{tpu_custom_call.1} parent=11 // pred_check
          %p148 = pneg %p65
        $region14: #{tpu_custom_call.1} parent=11 // pred_check_branch
          %150 = sbr.rel (%p148) target = $region16
        $region15: #{tpu_custom_call.1} parent=11 // pred_region
          %152 = vsyncadd [#allocation6], 0
          %s153 = sshll.u32 %s1, 4
          %s154 = int_to_ptr.hbm [resolvable:$true] %s153
          %s155 = sshll.u32 [#allocation5], 4
          %s156 = int_to_ptr.vmem [resolvable:$true] %s155
          %161 = dma.hbm_to_vmem [thread:$0]  %s154, 512, %s156, [#allocation6], 128, 128, 8
        $region16: #{tpu_custom_call.1} parent=11 // pred_fallthru
          _
        // Predicated region
        $region17: #{tpu_custom_call.1} parent=11 // pred_check
          %p162 = pneg %p86
        $region18: #{tpu_custom_call.1} parent=11 // pred_check_branch
          %164 = sbr.rel (%p162) target = $region20
        $region19: #{tpu_custom_call.1} parent=11 // pred_region
          %166 = vsyncadd [#allocation6], 0
          %s167 = sshll.u32 %s2, 4
          %s168 = int_to_ptr.hbm [resolvable:$true] %s167
          %s169 = sshll.u32 [#allocation7], 4
          %s170 = int_to_ptr.vmem [resolvable:$true] %s169
          %175 = dma.hbm_to_vmem [thread:$0]  %s168, 4096, %s170, [#allocation6], 128, 128, 8
        $region20: #{tpu_custom_call.1} parent=11 // pred_fallthru
          _
        // Predicated region
        $region21: #{tpu_custom_call.1} parent=11 // pred_check
          %p176 = pneg %p107
        $region22: #{tpu_custom_call.1} parent=11 // pred_check_branch
          %178 = sbr.rel (%p176) target = $region24
        $region23: #{tpu_custom_call.1} parent=11 // pred_region
          %180 = vsyncadd [#allocation9], 0
          %s182 = sshll.u32 %s3, 4
          %s183 = int_to_ptr.hbm [resolvable:$true] %s182
          %s184 = sshll.u32 [#allocation8], 4
          %s185 = int_to_ptr.vmem [resolvable:$true] %s184
          %187 = dma.hbm_to_vmem [thread:$0]  %s183, 128, %s185, [#allocation9]
        $region24: #{tpu_custom_call.1} parent=11 // pred_fallthru
          _
      $region12: #{tpu_custom_call.1} parent=5 // pred_fallthru
        _
      %p188 = scmp.lt.s32.totalorder %s18, 2
      // Predicated region
      $region25: #{tpu_custom_call.1} parent=5 // pred_check
        %p189 = pneg %p188
      $region26: #{tpu_custom_call.1} parent=5 // pred_check_branch
        %191 = sbr.rel (%p189) target = $region28
      $region27: #{tpu_custom_call.1} parent=5 // pred_region
        // Predicated region
        $region29: #{tpu_custom_call.1} parent=27 // pred_check
          %p192 = pneg %p38
        $region30: #{tpu_custom_call.1} parent=27 // pred_check_branch
          %194 = sbr.rel (%p192) target = $region32
        $region31: #{tpu_custom_call.1} parent=27 // pred_region
          %s195 = sand.u32 %s28, 1
          %s196 = scalar_lea.sflag [#allocation3], %s195
          %s197 = sand.u32 %s28, 1
          %s198 = smul.addr %s197, 8
          %s199 = scalar_lea.vmem [#allocation2], %s198
          %201 = vsyncadd %s196, 0
          %s202 = smul.addr %s18, 8
          %s203 = scalar_lea.hbm %s0, %s202
          %s205 = sshll.u32 %s203, 4
          %s206 = int_to_ptr.hbm [resolvable:$true] %s205
          %s207 = sshll.u32 %s199, 4
          %s208 = int_to_ptr.vmem [resolvable:$true] %s207
          %210 = dma.hbm_to_vmem [thread:$0]  %s206, 128, %s208, %s196
        $region32: #{tpu_custom_call.1} parent=27 // pred_fallthru
          _
      $region28: #{tpu_custom_call.1} parent=5 // pred_fallthru
        _
      %p211 = scmp.le.s32.totalorder 1, %s18
      %p212 = scmp.lt.s32.totalorder %s18, 3
      %p213 = pnand %p211, %p212
      %p214 = pneg %p213
      // Predicated region
      $region33: #{tpu_custom_call.1} parent=5 // pred_check
        _
      $region34: #{tpu_custom_call.1} parent=5 // pred_check_branch
        %216 = sbr.rel (%p213) target = $region36
      $region35: #{tpu_custom_call.1} parent=5 // pred_region
        %s217 = ssub.s32 %s18, 1
        %s218 = sand.u32 %s31, 1
        %s219 = scalar_lea.sflag [#allocation3], %s218
        %s220 = sand.u32 %s31, 1
        %s221 = smul.addr %s220, 8
        %s222 = scalar_lea.vmem [#allocation2], %s221
        // Predicated region
        $region37: #{tpu_custom_call.1} parent=35 // pred_check
          %p223 = pneg %p44
        $region38: #{tpu_custom_call.1} parent=35 // pred_check_branch
          %225 = sbr.rel (%p223) target = $region40
        $region39: #{tpu_custom_call.1} parent=35 // pred_region
          %227 = dma.done %s219, 128
        $region40: #{tpu_custom_call.1} parent=35 // pred_fallthru
          _
        // Predicated region
        $region41: #{tpu_custom_call.1} parent=35 // pred_check
          %p228 = pneg %p65
        $region42: #{tpu_custom_call.1} parent=35 // pred_check_branch
          %230 = sbr.rel (%p228) target = $region44
        $region43: #{tpu_custom_call.1} parent=35 // pred_region
          %232 = dma.done [#allocation6], 512
        $region44: #{tpu_custom_call.1} parent=35 // pred_fallthru
          _
        // Predicated region
        $region45: #{tpu_custom_call.1} parent=35 // pred_check
          %p233 = pneg %p86
        $region46: #{tpu_custom_call.1} parent=35 // pred_check_branch
          %235 = sbr.rel (%p233) target = $region48
        $region47: #{tpu_custom_call.1} parent=35 // pred_region
          %237 = dma.done [#allocation6], 4096
        $region48: #{tpu_custom_call.1} parent=35 // pred_fallthru
          _
        // Predicated region
        $region49: #{tpu_custom_call.1} parent=35 // pred_check
          %p238 = pneg %p107
        $region50: #{tpu_custom_call.1} parent=35 // pred_check_branch
          %240 = sbr.rel (%p238) target = $region52
        $region51: #{tpu_custom_call.1} parent=35 // pred_region
          %242 = dma.done [#allocation9], 128
        $region52: #{tpu_custom_call.1} parent=35 // pred_fallthru
          _
        %s243 = sand.u32 %s31, 1
        %s244 = scalar_lea.sflag [#allocation3], %s243
        %s245 = sand.u32 %s31, 1
        %s246 = smul.addr %s245, 8
        %s247 = scalar_lea.vmem [#allocation2], %s246
        %p248 = pneg %p44
        %p249 = pneg %p41
        %p250 = pneg %p65
        %p251 = pneg %p62
        %p252 = pneg %p86
        %p253 = pneg %p83
        %p254 = pneg %p107
        %p255 = pneg %p104
        %p256 = pneg %p133
        %p257 = pneg %p130
        %s258 = sand.u32 %s120, 1
        %s259 = scalar_lea.sflag [#allocation4], %s258
        %s260 = sand.u32 %s120, 1
        %s261 = smul.addr %s260, 16
        %s262 = scalar_lea.vmem [#allocation10], %s261
        %v264 = vld [vmem:[%s222] sm:$0xff]
        %v265 = vpack.c.bf16 %v264, %v264
        %v266 = vld [vmem:[#allocation5] sm:$0xff]
        %v267 = vld [vmem:[#allocation5 + $0x8] sm:$0xff]
        %v268 = vld [vmem:[#allocation5 + $0x10] sm:$0xff]
        %v269 = vld [vmem:[#allocation5 + $0x18] sm:$0xff]
        %v270 = vld [vmem:[#allocation8] ss:$4 sm:$0x3]
        %v272 = vperm.slane %v270, 0
        %v273 = vperm.slane %v270, 1
        %v280 = vunpack.c.l.b16 %v266
        %v281 = vunpack.c.h.b16 %v266
        %v282 = vunpack.c.l.b16 %v267
        %v283 = vunpack.c.h.b16 %v267
        %v284 = vunpack.c.l.b16 %v268
        %v285 = vunpack.c.h.b16 %v268
        %v286 = vunpack.c.l.b16 %v269
        %v287 = vunpack.c.h.b16 %v269
        %v288 = vpack.c.b16 %v282, %v280
        %v289 = vpack.c.b16 %v283, %v281
        %v290 = vpack.c.b16 %v286, %v284
        %v291 = vpack.c.b16 %v287, %v285
        %vm296 = vcmask 261120
        %v298 = vsel %vm296, %v265, 0
        %300 = vmatpush.bf16.msra.mxu0 0
        %301 = vmatpush.bf16.msra.mxu0 0
        %302 = vmatpush.bf16.msra.mxu0 0
        %303 = vmatpush.bf16.msra.mxu0 0
        %304 = vmatpush.bf16.msra.mxu0 0
        %305 = vmatpush.bf16.msra.mxu0 0
        %306 = vmatpush.bf16.msra.mxu0 %v290
        %307 = vmatpush.bf16.msra.mxu0 %v288
        %308 = vmatmul.bf16.gmra.mxu0 %v298
        %v309 = vpop.f32.mrf.mxu0
        %v310 = vadd.f32 %v272, %v309
        %v311 = vpop.f32.mrf.mxu0
        %312 = vdwg.mxu0
        %313 = vmatpush.bf16.msra.mxu0 0
        %314 = vmatpush.bf16.msra.mxu0 0
        %315 = vmatpush.bf16.msra.mxu0 0
        %316 = vmatpush.bf16.msra.mxu0 0
        %317 = vmatpush.bf16.msra.mxu0 0
        %318 = vmatpush.bf16.msra.mxu0 0
        %319 = vmatpush.bf16.msra.mxu0 %v291
        %320 = vmatpush.bf16.msra.mxu0 %v289
        %321 = vmatmul.bf16.gmra.mxu0 %v298
        %v322 = vpop.f32.mrf.mxu0
        %v323 = vadd.f32 %v273, %v322
        %v324 = vpop.f32.mrf.mxu0
        %325 = vdwg.mxu0
        %v326 = vmul.f32 %v310, 0.5
        %v327 = vmul.f32 %v323, 0.5
        %v328 = vmul.f32 %v310, 0.70710677
        %v329 = vmul.f32 %v323, 0.70710677
        %v330 = vmul.f32 %v328, %v328
        %v331 = vmin.f32 16.0, %v330
        %v332 = vmul.f32 %v331, 2.1237322e-06
        %v333 = vadd.f32 %v332, 0.00028619796
        %v334 = vmul.f32 %v331, %v333
        %v335 = vadd.f32 %v334, 0.0036580483
        %v336 = vmul.f32 %v331, %v335
        %v337 = vadd.f32 %v336, 0.05243302
        %v338 = vmul.f32 %v331, %v337
        %v339 = vadd.f32 %v338, 0.18741608
        %v340 = vmul.f32 %v331, %v339
        %v341 = vadd.f32 %v340, 1.1283791
        %v342 = vmul.f32 %v328, %v341
        %v343 = vmul.f32 %v331, 3.8918573e-05
        %v344 = vadd.f32 %v343, 0.001143296
        %v345 = vmul.f32 %v331, %v344
        %v346 = vadd.f32 %v345, 0.014752088
        %v347 = vmul.f32 %v331, %v346
        %v348 = vadd.f32 %v347, 0.112945676
        %v349 = vmul.f32 %v331, %v348
        %v350 = vadd.f32 %v349, 0.4994258
        %v351 = vmul.f32 %v331, %v350
        %v352 = vadd.f32 %v351, 1.0
        %v353 = vrcp.pop %v352
        %v354 = vmul.f32 %v352, %v353
        %v355 = vsub.f32 1.0, %v354
        %v356 = vmul.f32 %v353, %v355
        %v357 = vadd.f32 %v353, %v356
        %vm358 = vweird.f32 %v352
        %vm359 = vweird.f32 %v353
        %vm360 = vmor %vm358, %vm359
        %v361 = vsel %vm360, %v353, %v357
        %v362 = vand.u32 2147483647, %v352
        %vm363 = vcmp.eq.f32.partialorder %v362, 8.507059e+37
        %v364 = vand.u32 %v352, 2147483648
        %v365 = vor.u32 1.1754944e-38, %v364
        %v366 = vsel %vm363, %v365, %v361
        %v367 = vmul.f32 %v342, %v366
        %v368 = vmin.f32 %v367, 1.0
        %v369 = vmax.f32 %v368, -1.0
        %v370 = vmul.f32 %v329, %v329
        %v371 = vmin.f32 16.0, %v370
        %v372 = vmul.f32 %v371, 2.1237322e-06
        %v373 = vadd.f32 %v372, 0.00028619796
        %v374 = vmul.f32 %v371, %v373
        %v375 = vadd.f32 %v374, 0.0036580483
        %v376 = vmul.f32 %v371, %v375
        %v377 = vadd.f32 %v376, 0.05243302
        %v378 = vmul.f32 %v371, %v377
        %v379 = vadd.f32 %v378, 0.18741608
        %v380 = vmul.f32 %v371, %v379
        %v381 = vadd.f32 %v380, 1.1283791
        %v382 = vmul.f32 %v329, %v381
        %v383 = vmul.f32 %v371, 3.8918573e-05
        %v384 = vadd.f32 %v383, 0.001143296
        %v385 = vmul.f32 %v371, %v384
        %v386 = vadd.f32 %v385, 0.014752088
        %v387 = vmul.f32 %v371, %v386
        %v388 = vadd.f32 %v387, 0.112945676
        %v389 = vmul.f32 %v371, %v388
        %v390 = vadd.f32 %v389, 0.4994258
        %v391 = vmul.f32 %v371, %v390
        %v392 = vadd.f32 %v391, 1.0
        %v393 = vrcp.pop %v392
        %v394 = vmul.f32 %v392, %v393
        %v395 = vsub.f32 1.0, %v394
        %v396 = vmul.f32 %v393, %v395
        %v397 = vadd.f32 %v393, %v396
        %vm398 = vweird.f32 %v392
        %vm399 = vweird.f32 %v393
        %vm400 = vmor %vm398, %vm399
        %v401 = vsel %vm400, %v393, %v397
        %v402 = vand.u32 2147483647, %v392
        %vm403 = vcmp.eq.f32.partialorder %v402, 8.507059e+37
        %v404 = vand.u32 %v392, 2147483648
        %v405 = vor.u32 1.1754944e-38, %v404
        %v406 = vsel %vm403, %v405, %v401
        %v407 = vmul.f32 %v382, %v406
        %v408 = vmin.f32 %v407, 1.0
        %v409 = vmax.f32 %v408, -1.0
        %v410 = vadd.f32 %v369, 1.0
        %v411 = vadd.f32 %v409, 1.0
        %v412 = vmul.f32 %v326, %v410
        %v413 = vmul.f32 %v327, %v411
        %v414 = vpack.c.bf16 %v412, %v412
        %v415 = vpack.c.bf16 %v413, %v413
        %v416 = vld [vmem:[#allocation7] sm:$0xff]
        %v417 = vld [vmem:[#allocation7 + $0x8] sm:$0xff]
        %v418 = vld [vmem:[#allocation7 + $0x10] sm:$0xff]
        %v419 = vld [vmem:[#allocation7 + $0x18] sm:$0xff]
        %v420 = vld [vmem:[#allocation7 + $0x20] sm:$0xff]
        %v421 = vld [vmem:[#allocation7 + $0x28] sm:$0xff]
        %v422 = vld [vmem:[#allocation7 + $0x30] sm:$0xff]
        %v423 = vld [vmem:[#allocation7 + $0x38] sm:$0xff]
        %v424 = vld [vmem:[#allocation7 + $0x40] sm:$0xff]
        %v425 = vld [vmem:[#allocation7 + $0x48] sm:$0xff]
        %v426 = vld [vmem:[#allocation7 + $0x50] sm:$0xff]
        %v427 = vld [vmem:[#allocation7 + $0x58] sm:$0xff]
        %v428 = vld [vmem:[#allocation7 + $0x60] sm:$0xff]
        %v429 = vld [vmem:[#allocation7 + $0x68] sm:$0xff]
        %v430 = vld [vmem:[#allocation7 + $0x70] sm:$0xff]
        %v431 = vld [vmem:[#allocation7 + $0x78] sm:$0xff]
        %v432 = vld [vmem:[#allocation7 + $0x80] sm:$0xff]
        %v433 = vld [vmem:[#allocation7 + $0x88] sm:$0xff]
        %v434 = vld [vmem:[#allocation7 + $0x90] sm:$0xff]
        %v435 = vld [vmem:[#allocation7 + $0x98] sm:$0xff]
        %v436 = vld [vmem:[#allocation7 + $0xa0] sm:$0xff]
        %v437 = vld [vmem:[#allocation7 + $0xa8] sm:$0xff]
        %v438 = vld [vmem:[#allocation7 + $0xb0] sm:$0xff]
        %v439 = vld [vmem:[#allocation7 + $0xb8] sm:$0xff]
        %v440 = vld [vmem:[#allocation7 + $0xc0] sm:$0xff]
        %v441 = vld [vmem:[#allocation7 + $0xc8] sm:$0xff]
        %v442 = vld [vmem:[#allocation7 + $0xd0] sm:$0xff]
        %v443 = vld [vmem:[#allocation7 + $0xd8] sm:$0xff]
        %v444 = vld [vmem:[#allocation7 + $0xe0] sm:$0xff]
        %v445 = vld [vmem:[#allocation7 + $0xe8] sm:$0xff]
        %v446 = vld [vmem:[#allocation7 + $0xf0] sm:$0xff]
        %v447 = vld [vmem:[#allocation7 + $0xf8] sm:$0xff]
        %s448 = scalar_lea.vmem [#allocation8], 1
        %v449 = vld [vmem:[%s448] ss:$4 sm:$0x3]
        %v451 = vperm.slane %v449, 0
        %v452 = vperm.slane %v449, 1
        %v487 = vunpack.c.l.b16 %v416
        %v488 = vunpack.c.h.b16 %v416
        %v489 = vunpack.c.l.b16 %v417
        %v490 = vunpack.c.h.b16 %v417
        %v491 = vunpack.c.l.b16 %v418
        %v492 = vunpack.c.h.b16 %v418
        %v493 = vunpack.c.l.b16 %v419
        %v494 = vunpack.c.h.b16 %v419
        %v495 = vunpack.c.l.b16 %v420
        %v496 = vunpack.c.h.b16 %v420
        %v497 = vunpack.c.l.b16 %v421
        %v498 = vunpack.c.h.b16 %v421
        %v499 = vunpack.c.l.b16 %v422
        %v500 = vunpack.c.h.b16 %v422
        %v501 = vunpack.c.l.b16 %v423
        %v502 = vunpack.c.h.b16 %v423
        %v503 = vunpack.c.l.b16 %v424
        %v504 = vunpack.c.h.b16 %v424
        %v505 = vunpack.c.l.b16 %v425
        %v506 = vunpack.c.h.b16 %v425
        %v507 = vunpack.c.l.b16 %v426
        %v508 = vunpack.c.h.b16 %v426
        %v509 = vunpack.c.l.b16 %v427
        %v510 = vunpack.c.h.b16 %v427
        %v511 = vunpack.c.l.b16 %v428
        %v512 = vunpack.c.h.b16 %v428
        %v513 = vunpack.c.l.b16 %v429
        %v514 = vunpack.c.h.b16 %v429
        %v515 = vunpack.c.l.b16 %v430
        %v516 = vunpack.c.h.b16 %v430
        %v517 = vunpack.c.l.b16 %v431
        %v518 = vunpack.c.h.b16 %v431
        %v519 = vunpack.c.l.b16 %v432
        %v520 = vunpack.c.h.b16 %v432
        %v521 = vunpack.c.l.b16 %v433
        %v522 = vunpack.c.h.b16 %v433
        %v523 = vunpack.c.l.b16 %v434
        %v524 = vunpack.c.h.b16 %v434
        %v525 = vunpack.c.l.b16 %v435
        %v526 = vunpack.c.h.b16 %v435
        %v527 = vunpack.c.l.b16 %v436
        %v528 = vunpack.c.h.b16 %v436
        %v529 = vunpack.c.l.b16 %v437
        %v530 = vunpack.c.h.b16 %v437
        %v531 = vunpack.c.l.b16 %v438
        %v532 = vunpack.c.h.b16 %v438
        %v533 = vunpack.c.l.b16 %v439
        %v534 = vunpack.c.h.b16 %v439
        %v535 = vunpack.c.l.b16 %v440
        %v536 = vunpack.c.h.b16 %v440
        %v537 = vunpack.c.l.b16 %v441
        %v538 = vunpack.c.h.b16 %v441
        %v539 = vunpack.c.l.b16 %v442
        %v540 = vunpack.c.h.b16 %v442
        %v541 = vunpack.c.l.b16 %v443
        %v542 = vunpack.c.h.b16 %v443
        %v543 = vunpack.c.l.b16 %v444
        %v544 = vunpack.c.h.b16 %v444
        %v545 = vunpack.c.l.b16 %v445
        %v546 = vunpack.c.h.b16 %v445
        %v547 = vunpack.c.l.b16 %v446
        %v548 = vunpack.c.h.b16 %v446
        %v549 = vunpack.c.l.b16 %v447
        %v550 = vunpack.c.h.b16 %v447
        %v551 = vpack.c.b16 %v489, %v487
        %v552 = vpack.c.b16 %v490, %v488
        %v553 = vpack.c.b16 %v493, %v491
        %v554 = vpack.c.b16 %v494, %v492
        %v555 = vpack.c.b16 %v497, %v495
        %v556 = vpack.c.b16 %v498, %v496
        %v557 = vpack.c.b16 %v501, %v499
        %v558 = vpack.c.b16 %v502, %v500
        %v559 = vpack.c.b16 %v505, %v503
        %v560 = vpack.c.b16 %v506, %v504
        %v561 = vpack.c.b16 %v509, %v507
        %v562 = vpack.c.b16 %v510, %v508
        %v563 = vpack.c.b16 %v513, %v511
        %v564 = vpack.c.b16 %v514, %v512
        %v565 = vpack.c.b16 %v517, %v515
        %v566 = vpack.c.b16 %v518, %v516
        %v567 = vpack.c.b16 %v521, %v519
        %v568 = vpack.c.b16 %v522, %v520
        %v569 = vpack.c.b16 %v525, %v523
        %v570 = vpack.c.b16 %v526, %v524
        %v571 = vpack.c.b16 %v529, %v527
        %v572 = vpack.c.b16 %v530, %v528
        %v573 = vpack.c.b16 %v533, %v531
        %v574 = vpack.c.b16 %v534, %v532
        %v575 = vpack.c.b16 %v537, %v535
        %v576 = vpack.c.b16 %v538, %v536
        %v577 = vpack.c.b16 %v541, %v539
        %v578 = vpack.c.b16 %v542, %v540
        %v579 = vpack.c.b16 %v545, %v543
        %v580 = vpack.c.b16 %v546, %v544
        %v581 = vpack.c.b16 %v549, %v547
        %v582 = vpack.c.b16 %v550, %v548
        %615 = vmatpush.bf16.msra.mxu0 %v565
        %616 = vmatpush.bf16.msra.mxu0 %v563
        %617 = vmatpush.bf16.msra.mxu0 %v561
        %618 = vmatpush.bf16.msra.mxu0 %v559
        %619 = vmatpush.bf16.msra.mxu0 %v557
        %620 = vmatpush.bf16.msra.mxu0 %v555
        %621 = vmatpush.bf16.msra.mxu0 %v553
        %622 = vmatpush.bf16.msra.mxu0 %v551
        %623 = vmatmul.bf16.gmra.mxu0 %v414
        %v624 = vpop.f32.mrf.mxu0
        %v625 = vadd.f32 %v451, %v624
        %v626 = vpop.f32.mrf.mxu0
        %627 = vdwg.mxu0
        %628 = vmatpush.bf16.msra.mxu0 %v581
        %629 = vmatpush.bf16.msra.mxu0 %v579
        %630 = vmatpush.bf16.msra.mxu0 %v577
        %631 = vmatpush.bf16.msra.mxu0 %v575
        %632 = vmatpush.bf16.msra.mxu0 %v573
        %633 = vmatpush.bf16.msra.mxu0 %v571
        %634 = vmatpush.bf16.msra.mxu0 %v569
        %635 = vmatpush.bf16.msra.mxu0 %v567
        %636 = vmatmul.bf16.gmra.mxu0 %v415
        %v637 = vpop.f32.mrf.mxu0
        %v638 = vadd.f32 %v625, %v637
        %v639 = vpop.f32.mrf.mxu0
        %640 = vdwg.mxu0
        %641 = vmatpush.bf16.msra.mxu0 %v566
        %642 = vmatpush.bf16.msra.mxu0 %v564
        %643 = vmatpush.bf16.msra.mxu0 %v562
        %644 = vmatpush.bf16.msra.mxu0 %v560
        %645 = vmatpush.bf16.msra.mxu0 %v558
        %646 = vmatpush.bf16.msra.mxu0 %v556
        %647 = vmatpush.bf16.msra.mxu0 %v554
        %648 = vmatpush.bf16.msra.mxu0 %v552
        %649 = vmatmul.bf16.gmra.mxu0 %v414
        %v650 = vpop.f32.mrf.mxu0
        %v651 = vadd.f32 %v452, %v650
        %v652 = vpop.f32.mrf.mxu0
        %653 = vdwg.mxu0
        %654 = vmatpush.bf16.msra.mxu0 %v582
        %655 = vmatpush.bf16.msra.mxu0 %v580
        %656 = vmatpush.bf16.msra.mxu0 %v578
        %657 = vmatpush.bf16.msra.mxu0 %v576
        %658 = vmatpush.bf16.msra.mxu0 %v574
        %659 = vmatpush.bf16.msra.mxu0 %v572
        %660 = vmatpush.bf16.msra.mxu0 %v570
        %661 = vmatpush.bf16.msra.mxu0 %v568
        %662 = vmatmul.bf16.gmra.mxu0 %v415
        %v663 = vpop.f32.mrf.mxu0
        %v664 = vadd.f32 %v651, %v663
        %v665 = vpop.f32.mrf.mxu0
        %666 = vdwg.mxu0
        %v667 = vadd.f32 %v638, %v310
        %v668 = vadd.f32 %v664, %v323
        %v669 = vadd.f32 %v667, %v668
        %670 = vadd.xlane.f32.xlu0 %v669
        %v671 = vpop.xlane.xlu0 %670
        %v672 = vrcp.pop 256.0
        %v673 = vmul.f32 256.0, %v672
        %v674 = vsub.f32 1.0, %v673
        %v675 = vmul.f32 %v672, %v674
        %v676 = vadd.f32 %v672, %v675
        %vm677 = vweird.f32 %v672
        %v678 = vsel %vm677, %v672, %v676
        %v679 = vmul.f32 %v671, %v678
        %v680 = vsub.f32 %v667, %v679
        %v681 = vsub.f32 %v668, %v679
        %v682 = vmul.f32 %v680, %v680
        %v683 = vmul.f32 %v681, %v681
        %v684 = vadd.f32 %v682, %v683
        %685 = vadd.xlane.f32.xlu0 %v684
        %v686 = vpop.xlane.xlu0 %685
        %v687 = vmul.f32 %v686, %v678
        %v688 = vadd.f32 %v687, 1e-05
        %v689 = vrsqrt.pop %v688
        %v690 = vmul.f32 %v689, %v688
        %v691 = vmul.f32 %v690, %v689
        %v692 = vmul.f32 0.5, %v691
        %v693 = vsub.f32 1.5, %v692
        %v694 = vmul.f32 %v689, %v693
        %vm695 = vweird.f32 %v688
        %vm696 = vweird.f32 %v689
        %vm697 = vmor %vm695, %vm696
        %v698 = vsel %vm697, %v689, %v694
        %v699 = vmul.f32 %v680, %v698
        %v700 = vmul.f32 %v681, %v698
        %s701 = scalar_lea.vmem [#allocation8], 2
        %v702 = vld [vmem:[%s701] ss:$4 sm:$0x3]
        %v704 = vperm.slane %v702, 0
        %v705 = vperm.slane %v702, 1
        %v708 = vmul.f32 %v699, %v704
        %v709 = vmul.f32 %v700, %v705
        %s710 = scalar_lea.vmem [#allocation8], 3
        %v711 = vld [vmem:[%s710] ss:$4 sm:$0x3]
        %v713 = vperm.slane %v711, 0
        %v714 = vperm.slane %v711, 1
        %v717 = vadd.f32 %v708, %v713
        %v718 = vadd.f32 %v709, %v714
        %719 = vst [vmem:[%s262] sm:$0xff] %v717
        %720 = vst [vmem:[%s262 + $0x8] sm:$0xff] %v718
        %s721 = sand.u32 %s120, 1
        %s722 = scalar_lea.sflag [#allocation4], %s721
        %s723 = sand.u32 %s120, 1
        %s724 = smul.addr %s723, 16
        %s725 = scalar_lea.vmem [#allocation10], %s724
        // Predicated region
        $region53: #{tpu_custom_call.1} parent=35 // pred_check
          %p726 = pneg %p130
        $region54: #{tpu_custom_call.1} parent=35 // pred_check_branch
          %728 = sbr.rel (%p726) target = $region56
        $region55: #{tpu_custom_call.1} parent=35 // pred_region
          %730 = vsyncadd %s722, 0
          %s731 = smul.addr %s23, 2
          %s732 = smul.addr %s731, 8
          %s733 = scalar_lea.hbm %s4, %s732
          %s735 = sshll.u32 %s725, 4
          %s736 = int_to_ptr.vmem [resolvable:$true] %s735
          %s737 = sshll.u32 %s733, 4
          %s738 = int_to_ptr.hbm [resolvable:$true] %s737
          %740 = dma.vmem_to_hbm [thread:$0]  %s736, 256, %s738, %s722
        $region56: #{tpu_custom_call.1} parent=35 // pred_fallthru
          _
      $region36: #{tpu_custom_call.1} parent=5 // pred_fallthru
        _
      %p741 = scmp.le.s32.totalorder 2, %s18
      // Predicated region
      $region57: #{tpu_custom_call.1} parent=5 // pred_check
        %p742 = pneg %p741
      $region58: #{tpu_custom_call.1} parent=5 // pred_check_branch
        %744 = sbr.rel (%p742) target = $region60
      $region59: #{tpu_custom_call.1} parent=5 // pred_region
        %s745 = ssub.s32 %s18, 2
        // Predicated region
        $region61: #{tpu_custom_call.1} parent=59 // pred_check
          %p746 = pneg %p136
        $region62: #{tpu_custom_call.1} parent=59 // pred_check_branch
          %748 = sbr.rel (%p746) target = $region64
        $region63: #{tpu_custom_call.1} parent=59 // pred_region
          %s749 = sand.u32 %s121, 1
          %s750 = scalar_lea.sflag [#allocation4], %s749
          %s751 = sand.u32 %s121, 1
          %s752 = smul.addr %s751, 16
          %s753 = scalar_lea.vmem [#allocation10], %s752
          %755 = dma.done %s750, 256
        $region64: #{tpu_custom_call.1} parent=59 // pred_fallthru
          _
      $region60: #{tpu_custom_call.1} parent=5 // pred_fallthru
        _
    $region6: #{tpu_custom_call.1} parent=1 // loop_footer
      %s22 = sadd.s32 1, %s18
    $region7: #{tpu_custom_call.1} parent=1 // loop_footer_branch
      %17 = sbr.rel target = $region3
    $region8: #{tpu_custom_call.1} parent=1 // loop_exit
      _
    %756 = vsyncpa [#allocation3], 1
    %s757 = scalar_lea.sflag [#allocation3], 1
    %758 = vsyncpa %s757, 1
    %759 = vsyncpa [#allocation6], 1
    %760 = vsyncpa [#allocation9], 1
    %761 = vsyncpa [#allocation4], 1
    %s762 = scalar_lea.sflag [#allocation4], 1
    %763 = vsyncpa %s762, 1

// kernel: tpu_custom_call.1
$region0: #{tpu_custom_call.1}
  #allocation0 [shape = 'u32[]', space=smem, size = 0x4, offset = 0x4, fixed_abs, tag = 'smem constant byte address 0x4 - core index']
  #allocation1 [shape = 'u32[72,128]{1,0:T(1,128)}', space=vmem, size = 0x9000, scoped, tag = 'internal scratch']
  %s0 = inlined_call_operand.hbm [shape: f32[16,32], index: 0, kind: input, shape index: {}]
  %s1 = inlined_call_operand.hbm [shape: bf16[32,256], index: 1, kind: input, shape index: {}]
  %s2 = inlined_call_operand.hbm [shape: bf16[256,256], index: 2, kind: input, shape index: {}]
  %s3 = inlined_call_operand.hbm [shape: f32[4,256], index: 3, kind: input, shape index: {}]
  %s4 = inlined_call_operand.hbm [shape: f32[16,256], index: 4, kind: output, shape index: {}]
  %s5 = sld [smem:[#allocation0]]
  $region65: #{tpu_custom_call.1} parent=0
    _
  %s7 = ssub.s32 1, %s5
  %s8 = scalar_select 0, %s7, %s5
  $region1: #{tpu_custom_call.1} parent=0
    #allocation2 [shape = 'u8[8192]{0}', space=vmem, size = 0x2000, scoped, tag = 'input window, operand 0']
    #allocation3 [shape = 's32[2]{0}', space=sflag, size = 0x8, scoped, tag = 'scoped memory for tpu_custom_call.1']
    #allocation4 [shape = 's32[2]{0}', space=sflag, size = 0x8, scoped, tag = 'scoped memory for tpu_custom_call.1']
    #allocation5 [shape = 'u8[16384]{0}', space=vmem, size = 0x4000, scoped, tag = 'input window, operand 1, single buffered']
    #allocation6 [shape = 's32[1]{0}', space=sflag, size = 0x4, scoped, tag = 'scoped memory for tpu_custom_call.1']
    #allocation7 [shape = 'u8[131072]{0}', space=vmem, size = 0x20000, scoped, tag = 'input window, operand 2, single buffered']
    #allocation8 [shape = 'u8[4096]{0}', space=vmem, size = 0x1000, scoped, tag = 'input window, operand 3, single buffered']
    #allocation9 [shape = 's32[1]{0}', space=sflag, size = 0x4, scoped, tag = 'scoped memory for tpu_custom_call.1']
    #allocation10 [shape = 'u8[16384]{0}', space=vmem, size = 0x4000, scoped, tag = 'output window, operand 0']
    %9 = vsyncpa [#allocation3], 0
    %s10 = scalar_lea.sflag [#allocation3], 1
    %11 = vsyncpa %s10, 0
    %12 = vsyncpa [#allocation6], 0
    %13 = vsyncpa [#allocation9], 0
    %14 = vsyncpa [#allocation4], 0
    %s15 = scalar_lea.sflag [#allocation4], 1
    %16 = vsyncpa %s15, 0
    loop: start=0, step=1, limit=4
    $region2: #{tpu_custom_call.1} parent=1 // loop_pre_header
      _
    $region3: #{tpu_custom_call.1} parent=1 // loop_header
      %s18 = sphi 0, %s22
      %p19 = scmp.ge.s32.totalorder %s18, 4
      %s28 = sphi 0, %s30
      %s31 = sphi 0, %s28
      %s32 = sphi 0, %s31
      %s48 = sphi 0, %s32
      %s52 = sphi 0, %s52
      %s54 = sphi 0, %s52
      %s55 = sphi 0, %s54
      %s69 = sphi 0, %s55
      %s73 = sphi 0, %s73
      %s75 = sphi 0, %s73
      %s76 = sphi 0, %s75
      %s90 = sphi 0, %s76
      %s94 = sphi 0, %s94
      %s96 = sphi 0, %s94
      %s97 = sphi 0, %s96
      %s111 = sphi 0, %s97
      %s117 = sphi 0, %s119
      %s120 = sphi 0, %s117
      %s121 = sphi 0, %s120
      %s137 = sphi 0, %s121
    $region4: #{tpu_custom_call.1} parent=1 // loop_header_branch
      %21 = sbr.rel (%p19) target = $region8
    $region5: #{tpu_custom_call.1} parent=1 // loop_body
      %s23 = ssub.s32 %s18, 1
      %s24 = ssub.s32 %s18, 2
      %s25 = sadd.s32 %s18, 1
      %s26 = ssub.s32 %s18, %s25
      %p27 = scmp.eq.s32.totalorder %s26, 0
      %s29 = sadd.s32 %s28, 1
      %s30 = scalar_select %p27, %s28, %s29
      %p33 = pneg %p27
      %p34 = scmp.eq.s32.totalorder %s18, 1
      %p35 = por %p33, %p34
      %p36 = scmp.ne.s32.totalorder %s28, %s31
      %p37 = scmp.eq.s32.totalorder %s18, 0
      %p38 = por %p36, %p37
      %p39 = scmp.ne.s32.totalorder %s28, %s31
      %p40 = scmp.eq.s32.totalorder %s23, 1
      %p41 = por %p39, %p40
      %p42 = scmp.ne.s32.totalorder %s31, %s32
      %p43 = scmp.eq.s32.totalorder %s23, 0
      %p44 = por %p42, %p43
      %p45 = scmp.ne.s32.totalorder %s31, %s32
      %p46 = scmp.eq.s32.totalorder %s24, 1
      %p47 = por %p45, %p46
      %p49 = scmp.ne.s32.totalorder %s32, %s48
      %p50 = scmp.eq.s32.totalorder %s24, 0
      %p51 = por %p49, %p50
      %s53 = sadd.s32 %s52, 1
      %p56 = scmp.eq.s32.totalorder %s18, 1
      %p57 = scmp.ne.s32.totalorder %s52, %s54
      %p58 = scmp.eq.s32.totalorder %s18, 0
      %p59 = por %p57, %p58
      %p60 = scmp.ne.s32.totalorder %s52, %s54
      %p61 = scmp.eq.s32.totalorder %s23, 1
      %p62 = por %p60, %p61
      %p63 = scmp.ne.s32.totalorder %s54, %s55
      %p64 = scmp.eq.s32.totalorder %s23, 0
      %p65 = por %p63, %p64
      %p66 = scmp.ne.s32.totalorder %s54, %s55
      %p67 = scmp.eq.s32.totalorder %s24, 1
      %p68 = por %p66, %p67
      %p70 = scmp.ne.s32.totalorder %s55, %s69
      %p71 = scmp.eq.s32.totalorder %s24, 0
      %p72 = por %p70, %p71
      %s74 = sadd.s32 %s73, 1
      %p77 = scmp.eq.s32.totalorder %s18, 1
      %p78 = scmp.ne.s32.totalorder %s73, %s75
      %p79 = scmp.eq.s32.totalorder %s18, 0
      %p80 = por %p78, %p79
      %p81 = scmp.ne.s32.totalorder %s73, %s75
      %p82 = scmp.eq.s32.totalorder %s23, 1
      %p83 = por %p81, %p82
      %p84 = scmp.ne.s32.totalorder %s75, %s76
      %p85 = scmp.eq.s32.totalorder %s23, 0
      %p86 = por %p84, %p85
      %p87 = scmp.ne.s32.totalorder %s75, %s76
      %p88 = scmp.eq.s32.totalorder %s24, 1
      %p89 = por %p87, %p88
      %p91 = scmp.ne.s32.totalorder %s76, %s90
      %p92 = scmp.eq.s32.totalorder %s24, 0
      %p93 = por %p91, %p92
      %s95 = sadd.s32 %s94, 1
      %p98 = scmp.eq.s32.totalorder %s18, 1
      %p99 = scmp.ne.s32.totalorder %s94, %s96
      %p100 = scmp.eq.s32.totalorder %s18, 0
      %p101 = por %p99, %p100
      %p102 = scmp.ne.s32.totalorder %s94, %s96
      %p103 = scmp.eq.s32.totalorder %s23, 1
      %p104 = por %p102, %p103
      %p105 = scmp.ne.s32.totalorder %s96, %s97
      %p106 = scmp.eq.s32.totalorder %s23, 0
      %p107 = por %p105, %p106
      %p108 = scmp.ne.s32.totalorder %s96, %s97
      %p109 = scmp.eq.s32.totalorder %s24, 1
      %p110 = por %p108, %p109
      %p112 = scmp.ne.s32.totalorder %s97, %s111
      %p113 = scmp.eq.s32.totalorder %s24, 0
      %p114 = por %p112, %p113
      %s115 = ssub.s32 %s18, %s25
      %p116 = scmp.eq.s32.totalorder %s115, 0
      %s118 = sadd.s32 %s117, 1
      %s119 = scalar_select %p116, %s117, %s118
      %p122 = pneg %p116
      %p123 = scmp.eq.s32.totalorder %s18, 1
      %p124 = por %p122, %p123
      %p125 = scmp.ne.s32.totalorder %s117, %s120
      %p126 = scmp.eq.s32.totalorder %s18, 0
      %p127 = por %p125, %p126
      %p128 = scmp.ne.s32.totalorder %s117, %s120
      %p129 = scmp.eq.s32.totalorder %s23, 1
      %p130 = por %p128, %p129
      %p131 = scmp.ne.s32.totalorder %s120, %s121
      %p132 = scmp.eq.s32.totalorder %s23, 0
      %p133 = por %p131, %p132
      %p134 = scmp.ne.s32.totalorder %s120, %s121
      %p135 = scmp.eq.s32.totalorder %s24, 1
      %p136 = por %p134, %p135
      %p138 = scmp.ne.s32.totalorder %s121, %s137
      %p139 = scmp.eq.s32.totalorder %s24, 0
      %p140 = por %p138, %p139
      %p141 = scmp.le.s32.totalorder 1, %s18
      %p142 = scmp.lt.s32.totalorder %s18, 3
      %p143 = pnand %p141, %p142
      %p144 = pneg %p143
      // Predicated region
      $region9: #{tpu_custom_call.1} parent=5 // pred_check
        _
      $region10: #{tpu_custom_call.1} parent=5 // pred_check_branch
        %146 = sbr.rel (%p143) target = $region12
      $region11: #{tpu_custom_call.1} parent=5 // pred_region
        %s147 = ssub.s32 %s18, 1
        // Predicated region
        $region13: #{tpu_custom_call.1} parent=11 // pred_check
          %p148 = pneg %p65
        $region14: #{tpu_custom_call.1} parent=11 // pred_check_branch
          %150 = sbr.rel (%p148) target = $region16
        $region15: #{tpu_custom_call.1} parent=11 // pred_region
          %152 = vsyncadd [#allocation6], 0
          %s153 = sshll.u32 %s1, 4
          %s154 = int_to_ptr.hbm [resolvable:$true] %s153
          %s155 = sshll.u32 [#allocation5], 4
          %s156 = int_to_ptr.vmem [resolvable:$true] %s155
          %161 = dma.hbm_to_vmem [thread:$0]  %s154, 512, %s156, [#allocation6], 128, 128, 8
        $region16: #{tpu_custom_call.1} parent=11 // pred_fallthru
          _
        // Predicated region
        $region17: #{tpu_custom_call.1} parent=11 // pred_check
          %p162 = pneg %p86
        $region18: #{tpu_custom_call.1} parent=11 // pred_check_branch
          %164 = sbr.rel (%p162) target = $region20
        $region19: #{tpu_custom_call.1} parent=11 // pred_region
          %166 = vsyncadd [#allocation6], 0
          %s167 = sshll.u32 %s2, 4
          %s168 = int_to_ptr.hbm [resolvable:$true] %s167
          %s169 = sshll.u32 [#allocation7], 4
          %s170 = int_to_ptr.vmem [resolvable:$true] %s169
          %175 = dma.hbm_to_vmem [thread:$0]  %s168, 4096, %s170, [#allocation6], 128, 128, 8
        $region20: #{tpu_custom_call.1} parent=11 // pred_fallthru
          _
        // Predicated region
        $region21: #{tpu_custom_call.1} parent=11 // pred_check
          %p176 = pneg %p107
        $region22: #{tpu_custom_call.1} parent=11 // pred_check_branch
          %178 = sbr.rel (%p176) target = $region24
        $region23: #{tpu_custom_call.1} parent=11 // pred_region
          %180 = vsyncadd [#allocation9], 0
          %s182 = sshll.u32 %s3, 4
          %s183 = int_to_ptr.hbm [resolvable:$true] %s182
          %s184 = sshll.u32 [#allocation8], 4
          %s185 = int_to_ptr.vmem [resolvable:$true] %s184
          %187 = dma.hbm_to_vmem [thread:$0]  %s183, 128, %s185, [#allocation9]
        $region24: #{tpu_custom_call.1} parent=11 // pred_fallthru
          _
      $region12: #{tpu_custom_call.1} parent=5 // pred_fallthru
        _
      %p188 = scmp.lt.s32.totalorder %s18, 2
      // Predicated region
      $region25: #{tpu_custom_call.1} parent=5 // pred_check
        %p189 = pneg %p188
      $region26: #{tpu_custom_call.1} parent=5 // pred_check_branch
        %191 = sbr.rel (%p189) target = $region28
      $region27: #{tpu_custom_call.1} parent=5 // pred_region
        // Predicated region
        $region29: #{tpu_custom_call.1} parent=27 // pred_check
          %p192 = pneg %p38
        $region30: #{tpu_custom_call.1} parent=27 // pred_check_branch
          %194 = sbr.rel (%p192) target = $region32
        $region31: #{tpu_custom_call.1} parent=27 // pred_region
          %s195 = sand.u32 %s28, 1
          %s196 = scalar_lea.sflag [#allocation3], %s195
          %s197 = sand.u32 %s28, 1
          %s198 = smul.addr %s197, 8
          %s199 = scalar_lea.vmem [#allocation2], %s198
          %201 = vsyncadd %s196, 0
          %s202 = smul.addr %s18, 8
          %s203 = scalar_lea.hbm %s0, %s202
          %s205 = sshll.u32 %s203, 4
          %s206 = int_to_ptr.hbm [resolvable:$true] %s205
          %s207 = sshll.u32 %s199, 4
          %s208 = int_to_ptr.vmem [resolvable:$true] %s207
          %210 = dma.hbm_to_vmem [thread:$0]  %s206, 128, %s208, %s196
        $region32: #{tpu_custom_call.1} parent=27 // pred_fallthru
          _
      $region28: #{tpu_custom_call.1} parent=5 // pred_fallthru
        _
      %p211 = scmp.le.s32.totalorder 1, %s18
      %p212 = scmp.lt.s32.totalorder %s18, 3
      %p213 = pnand %p211, %p212
      %p214 = pneg %p213
      // Predicated region
      $region33: #{tpu_custom_call.1} parent=5 // pred_check
        _
      $region34: #{tpu_custom_call.1} parent=5 // pred_check_branch
        %216 = sbr.rel (%p213) target = $region36
      $region35: #{tpu_custom_call.1} parent=5 // pred_region
        %s217 = ssub.s32 %s18, 1
        %s218 = sand.u32 %s31, 1
        %s219 = scalar_lea.sflag [#allocation3], %s218
        %s220 = sand.u32 %s31, 1
        %s221 = smul.addr %s220, 8
        %s222 = scalar_lea.vmem [#allocation2], %s221
        // Predicated region
        $region37: #{tpu_custom_call.1} parent=35 // pred_check
          %p223 = pneg %p44
        $region38: #{tpu_custom_call.1} parent=35 // pred_check_branch
          %225 = sbr.rel (%p223) target = $region40
        $region39: #{tpu_custom_call.1} parent=35 // pred_region
          %227 = dma.done %s219, 128
        $region40: #{tpu_custom_call.1} parent=35 // pred_fallthru
          _
        // Predicated region
        $region41: #{tpu_custom_call.1} parent=35 // pred_check
          %p228 = pneg %p65
        $region42: #{tpu_custom_call.1} parent=35 // pred_check_branch
          %230 = sbr.rel (%p228) target = $region44
        $region43: #{tpu_custom_call.1} parent=35 // pred_region
          %232 = dma.done [#allocation6], 512
        $region44: #{tpu_custom_call.1} parent=35 // pred_fallthru
          _
        // Predicated region
        $region45: #{tpu_custom_call.1} parent=35 // pred_check
          %p233 = pneg %p86
        $region46: #{tpu_custom_call.1} parent=35 // pred_check_branch
          %235 = sbr.rel (%p233) target = $region48
        $region47: #{tpu_custom_call.1} parent=35 // pred_region
          %237 = dma.done [#allocation6], 4096
        $region48: #{tpu_custom_call.1} parent=35 // pred_fallthru
          _
        // Predicated region
        $region49: #{tpu_custom_call.1} parent=35 // pred_check
          %p238 = pneg %p107
        $region50: #{tpu_custom_call.1} parent=35 // pred_check_branch
          %240 = sbr.rel (%p238) target = $region52
        $region51: #{tpu_custom_call.1} parent=35 // pred_region
          %242 = dma.done [#allocation9], 128
        $region52: #{tpu_custom_call.1} parent=35 // pred_fallthru
          _
        %s243 = sand.u32 %s31, 1
        %s244 = scalar_lea.sflag [#allocation3], %s243
        %s245 = sand.u32 %s31, 1
        %s246 = smul.addr %s245, 8
        %s247 = scalar_lea.vmem [#allocation2], %s246
        %p248 = pneg %p44
        %p249 = pneg %p41
        %p250 = pneg %p65
        %p251 = pneg %p62
        %p252 = pneg %p86
        %p253 = pneg %p83
        %p254 = pneg %p107
        %p255 = pneg %p104
        %p256 = pneg %p133
        %p257 = pneg %p130
        %s258 = sand.u32 %s120, 1
        %s259 = scalar_lea.sflag [#allocation4], %s258
        %s260 = sand.u32 %s120, 1
        %s261 = smul.addr %s260, 16
        %s262 = scalar_lea.vmem [#allocation10], %s261
        %v264 = vld [vmem:[%s222] sm:$0xff]
        %v265 = vpack.c.bf16 %v264, %v264
        %v266 = vld [vmem:[#allocation5] sm:$0xff]
        %v267 = vld [vmem:[#allocation5 + $0x8] sm:$0xff]
        %v268 = vld [vmem:[#allocation5 + $0x10] sm:$0xff]
        %v269 = vld [vmem:[#allocation5 + $0x18] sm:$0xff]
        %v270 = vld [vmem:[#allocation8] ss:$4 sm:$0x3]
        %v272 = vperm.slane %v270, 0
        %v273 = vperm.slane %v270, 1
        %v280 = vunpack.c.l.b16 %v266
        %v281 = vunpack.c.h.b16 %v266
        %v282 = vunpack.c.l.b16 %v267
        %v283 = vunpack.c.h.b16 %v267
        %v284 = vunpack.c.l.b16 %v268
        %v285 = vunpack.c.h.b16 %v268
        %v286 = vunpack.c.l.b16 %v269
        %v287 = vunpack.c.h.b16 %v269
        %v288 = vpack.c.b16 %v282, %v280
        %v289 = vpack.c.b16 %v283, %v281
        %v290 = vpack.c.b16 %v286, %v284
        %v291 = vpack.c.b16 %v287, %v285
        %vm296 = vcmask 261120
        %v298 = vsel %vm296, %v265, 0
        %300 = vmatpush.bf16.msra.mxu0 0
        %301 = vmatpush.bf16.msra.mxu0 0
        %302 = vmatpush.bf16.msra.mxu0 0
        %303 = vmatpush.bf16.msra.mxu0 0
        %304 = vmatpush.bf16.msra.mxu0 0
        %305 = vmatpush.bf16.msra.mxu0 0
        %306 = vmatpush.bf16.msra.mxu0 %v290
        %307 = vmatpush.bf16.msra.mxu0 %v288
        %308 = vmatmul.bf16.gmra.mxu0 %v298
        %v309 = vpop.f32.mrf.mxu0
        %v310 = vadd.f32 %v272, %v309
        %v311 = vpop.f32.mrf.mxu0
        %312 = vdwg.mxu0
        %313 = vmatpush.bf16.msra.mxu0 0
        %314 = vmatpush.bf16.msra.mxu0 0
        %315 = vmatpush.bf16.msra.mxu0 0
        %316 = vmatpush.bf16.msra.mxu0 0
        %317 = vmatpush.bf16.msra.mxu0 0
        %318 = vmatpush.bf16.msra.mxu0 0
        %319 = vmatpush.bf16.msra.mxu0 %v291
        %320 = vmatpush.bf16.msra.mxu0 %v289
        %321 = vmatmul.bf16.gmra.mxu0 %v298
        %v322 = vpop.f32.mrf.mxu0
        %v323 = vadd.f32 %v273, %v322
        %v324 = vpop.f32.mrf.mxu0
        %325 = vdwg.mxu0
        %v326 = vmul.f32 %v310, 0.5
        %v327 = vmul.f32 %v323, 0.5
        %v328 = vmul.f32 %v310, 0.70710677
        %v329 = vmul.f32 %v323, 0.70710677
        %v330 = vmul.f32 %v328, %v328
        %v331 = vmin.f32 16.0, %v330
        %v332 = vmul.f32 %v331, 2.1237322e-06
        %v333 = vadd.f32 %v332, 0.00028619796
        %v334 = vmul.f32 %v331, %v333
        %v335 = vadd.f32 %v334, 0.0036580483
        %v336 = vmul.f32 %v331, %v335
        %v337 = vadd.f32 %v336, 0.05243302
        %v338 = vmul.f32 %v331, %v337
        %v339 = vadd.f32 %v338, 0.18741608
        %v340 = vmul.f32 %v331, %v339
        %v341 = vadd.f32 %v340, 1.1283791
        %v342 = vmul.f32 %v328, %v341
        %v343 = vmul.f32 %v331, 3.8918573e-05
        %v344 = vadd.f32 %v343, 0.001143296
        %v345 = vmul.f32 %v331, %v344
        %v346 = vadd.f32 %v345, 0.014752088
        %v347 = vmul.f32 %v331, %v346
        %v348 = vadd.f32 %v347, 0.112945676
        %v349 = vmul.f32 %v331, %v348
        %v350 = vadd.f32 %v349, 0.4994258
        %v351 = vmul.f32 %v331, %v350
        %v352 = vadd.f32 %v351, 1.0
        %v353 = vrcp.pop %v352
        %v354 = vmul.f32 %v352, %v353
        %v355 = vsub.f32 1.0, %v354
        %v356 = vmul.f32 %v353, %v355
        %v357 = vadd.f32 %v353, %v356
        %vm358 = vweird.f32 %v352
        %vm359 = vweird.f32 %v353
        %vm360 = vmor %vm358, %vm359
        %v361 = vsel %vm360, %v353, %v357
        %v362 = vand.u32 2147483647, %v352
        %vm363 = vcmp.eq.f32.partialorder %v362, 8.507059e+37
        %v364 = vand.u32 %v352, 2147483648
        %v365 = vor.u32 1.1754944e-38, %v364
        %v366 = vsel %vm363, %v365, %v361
        %v367 = vmul.f32 %v342, %v366
        %v368 = vmin.f32 %v367, 1.0
        %v369 = vmax.f32 %v368, -1.0
        %v370 = vmul.f32 %v329, %v329
        %v371 = vmin.f32 16.0, %v370
        %v372 = vmul.f32 %v371, 2.1237322e-06
        %v373 = vadd.f32 %v372, 0.00028619796
        %v374 = vmul.f32 %v371, %v373
        %v375 = vadd.f32 %v374, 0.0036580483
        %v376 = vmul.f32 %v371, %v375
        %v377 = vadd.f32 %v376, 0.05243302
        %v378 = vmul.f32 %v371, %v377
        %v379 = vadd.f32 %v378, 0.18741608
        %v380 = vmul.f32 %v371, %v379
        %v381 = vadd.f32 %v380, 1.1283791
        %v382 = vmul.f32 %v329, %v381
        %v383 = vmul.f32 %v371, 3.8918573e-05
        %v384 = vadd.f32 %v383, 0.001143296
        %v385 = vmul.f32 %v371, %v384
        %v386 = vadd.f32 %v385, 0.014752088
        %v387 = vmul.f32 %v371, %v386
        %v388 = vadd.f32 %v387, 0.112945676
        %v389 = vmul.f32 %v371, %v388
        %v390 = vadd.f32 %v389, 0.4994258
        %v391 = vmul.f32 %v371, %v390
        %v392 = vadd.f32 %v391, 1.0
        %v393 = vrcp.pop %v392
        %v394 = vmul.f32 %v392, %v393
        %v395 = vsub.f32 1.0, %v394
        %v396 = vmul.f32 %v393, %v395
        %v397 = vadd.f32 %v393, %v396
        %vm398 = vweird.f32 %v392
        %vm399 = vweird.f32 %v393
        %vm400 = vmor %vm398, %vm399
        %v401 = vsel %vm400, %v393, %v397
        %v402 = vand.u32 2147483647, %v392
        %vm403 = vcmp.eq.f32.partialorder %v402, 8.507059e+37
        %v404 = vand.u32 %v392, 2147483648
        %v405 = vor.u32 1.1754944e-38, %v404
        %v406 = vsel %vm403, %v405, %v401
        %v407 = vmul.f32 %v382, %v406
        %v408 = vmin.f32 %v407, 1.0
        %v409 = vmax.f32 %v408, -1.0
        %v410 = vadd.f32 %v369, 1.0
        %v411 = vadd.f32 %v409, 1.0
        %v412 = vmul.f32 %v326, %v410
        %v413 = vmul.f32 %v327, %v411
        %v414 = vpack.c.bf16 %v412, %v412
        %v415 = vpack.c.bf16 %v413, %v413
        %v416 = vld [vmem:[#allocation7] sm:$0xff]
        %v417 = vld [vmem:[#allocation7 + $0x8] sm:$0xff]
        %v418 = vld [vmem:[#allocation7 + $0x10] sm:$0xff]
        %v419 = vld [vmem:[#allocation7 + $0x18] sm:$0xff]
        %v420 = vld [vmem:[#allocation7 + $0x20] sm:$0xff]
        %v421 = vld [vmem:[#allocation7 + $0x28] sm:$0xff]
        %v422 = vld [vmem:[#allocation7 + $0x30] sm:$0xff]
        %v423 = vld [vmem:[#allocation7 + $0x38] sm:$0xff]
        %v424 = vld [vmem:[#allocation7 + $0x40] sm:$0xff]
        %v425 = vld [vmem:[#allocation7 + $0x48] sm:$0xff]
        %v426 = vld [vmem:[#allocation7 + $0x50] sm:$0xff]
        %v427 = vld [vmem:[#allocation7 + $0x58] sm:$0xff]
        %v428 = vld [vmem:[#allocation7 + $0x60] sm:$0xff]
        %v429 = vld [vmem:[#allocation7 + $0x68] sm:$0xff]
        %v430 = vld [vmem:[#allocation7 + $0x70] sm:$0xff]
        %v431 = vld [vmem:[#allocation7 + $0x78] sm:$0xff]
        %v432 = vld [vmem:[#allocation7 + $0x80] sm:$0xff]
        %v433 = vld [vmem:[#allocation7 + $0x88] sm:$0xff]
        %v434 = vld [vmem:[#allocation7 + $0x90] sm:$0xff]
        %v435 = vld [vmem:[#allocation7 + $0x98] sm:$0xff]
        %v436 = vld [vmem:[#allocation7 + $0xa0] sm:$0xff]
        %v437 = vld [vmem:[#allocation7 + $0xa8] sm:$0xff]
        %v438 = vld [vmem:[#allocation7 + $0xb0] sm:$0xff]
        %v439 = vld [vmem:[#allocation7 + $0xb8] sm:$0xff]
        %v440 = vld [vmem:[#allocation7 + $0xc0] sm:$0xff]
        %v441 = vld [vmem:[#allocation7 + $0xc8] sm:$0xff]
        %v442 = vld [vmem:[#allocation7 + $0xd0] sm:$0xff]
        %v443 = vld [vmem:[#allocation7 + $0xd8] sm:$0xff]
        %v444 = vld [vmem:[#allocation7 + $0xe0] sm:$0xff]
        %v445 = vld [vmem:[#allocation7 + $0xe8] sm:$0xff]
        %v446 = vld [vmem:[#allocation7 + $0xf0] sm:$0xff]
        %v447 = vld [vmem:[#allocation7 + $0xf8] sm:$0xff]
        %s448 = scalar_lea.vmem [#allocation8], 1
        %v449 = vld [vmem:[%s448] ss:$4 sm:$0x3]
        %v451 = vperm.slane %v449, 0
        %v452 = vperm.slane %v449, 1
        %v487 = vunpack.c.l.b16 %v416
        %v488 = vunpack.c.h.b16 %v416
        %v489 = vunpack.c.l.b16 %v417
        %v490 = vunpack.c.h.b16 %v417
        %v491 = vunpack.c.l.b16 %v418
        %v492 = vunpack.c.h.b16 %v418
        %v493 = vunpack.c.l.b16 %v419
        %v494 = vunpack.c.h.b16 %v419
        %v495 = vunpack.c.l.b16 %v420
        %v496 = vunpack.c.h.b16 %v420
        %v497 = vunpack.c.l.b16 %v421
        %v498 = vunpack.c.h.b16 %v421
        %v499 = vunpack.c.l.b16 %v422
        %v500 = vunpack.c.h.b16 %v422
        %v501 = vunpack.c.l.b16 %v423
        %v502 = vunpack.c.h.b16 %v423
        %v503 = vunpack.c.l.b16 %v424
        %v504 = vunpack.c.h.b16 %v424
        %v505 = vunpack.c.l.b16 %v425
        %v506 = vunpack.c.h.b16 %v425
        %v507 = vunpack.c.l.b16 %v426
        %v508 = vunpack.c.h.b16 %v426
        %v509 = vunpack.c.l.b16 %v427
        %v510 = vunpack.c.h.b16 %v427
        %v511 = vunpack.c.l.b16 %v428
        %v512 = vunpack.c.h.b16 %v428
        %v513 = vunpack.c.l.b16 %v429
        %v514 = vunpack.c.h.b16 %v429
        %v515 = vunpack.c.l.b16 %v430
        %v516 = vunpack.c.h.b16 %v430
        %v517 = vunpack.c.l.b16 %v431
        %v518 = vunpack.c.h.b16 %v431
        %v519 = vunpack.c.l.b16 %v432
        %v520 = vunpack.c.h.b16 %v432
        %v521 = vunpack.c.l.b16 %v433
        %v522 = vunpack.c.h.b16 %v433
        %v523 = vunpack.c.l.b16 %v434
        %v524 = vunpack.c.h.b16 %v434
        %v525 = vunpack.c.l.b16 %v435
        %v526 = vunpack.c.h.b16 %v435
        %v527 = vunpack.c.l.b16 %v436
        %v528 = vunpack.c.h.b16 %v436
        %v529 = vunpack.c.l.b16 %v437
        %v530 = vunpack.c.h.b16 %v437
        %v531 = vunpack.c.l.b16 %v438
        %v532 = vunpack.c.h.b16 %v438
        %v533 = vunpack.c.l.b16 %v439
        %v534 = vunpack.c.h.b16 %v439
        %v535 = vunpack.c.l.b16 %v440
        %v536 = vunpack.c.h.b16 %v440
        %v537 = vunpack.c.l.b16 %v441
        %v538 = vunpack.c.h.b16 %v441
        %v539 = vunpack.c.l.b16 %v442
        %v540 = vunpack.c.h.b16 %v442
        %v541 = vunpack.c.l.b16 %v443
        %v542 = vunpack.c.h.b16 %v443
        %v543 = vunpack.c.l.b16 %v444
        %v544 = vunpack.c.h.b16 %v444
        %v545 = vunpack.c.l.b16 %v445
        %v546 = vunpack.c.h.b16 %v445
        %v547 = vunpack.c.l.b16 %v446
        %v548 = vunpack.c.h.b16 %v446
        %v549 = vunpack.c.l.b16 %v447
        %v550 = vunpack.c.h.b16 %v447
        %v551 = vpack.c.b16 %v489, %v487
        %v552 = vpack.c.b16 %v490, %v488
        %v553 = vpack.c.b16 %v493, %v491
        %v554 = vpack.c.b16 %v494, %v492
        %v555 = vpack.c.b16 %v497, %v495
        %v556 = vpack.c.b16 %v498, %v496
        %v557 = vpack.c.b16 %v501, %v499
        %v558 = vpack.c.b16 %v502, %v500
        %v559 = vpack.c.b16 %v505, %v503
        %v560 = vpack.c.b16 %v506, %v504
        %v561 = vpack.c.b16 %v509, %v507
        %v562 = vpack.c.b16 %v510, %v508
        %v563 = vpack.c.b16 %v513, %v511
        %v564 = vpack.c.b16 %v514, %v512
        %v565 = vpack.c.b16 %v517, %v515
        %v566 = vpack.c.b16 %v518, %v516
        %v567 = vpack.c.b16 %v521, %v519
        %v568 = vpack.c.b16 %v522, %v520
        %v569 = vpack.c.b16 %v525, %v523
        %v570 = vpack.c.b16 %v526, %v524
        %v571 = vpack.c.b16 %v529, %v527
        %v572 = vpack.c.b16 %v530, %v528
        %v573 = vpack.c.b16 %v533, %v531
        %v574 = vpack.c.b16 %v534, %v532
        %v575 = vpack.c.b16 %v537, %v535
        %v576 = vpack.c.b16 %v538, %v536
        %v577 = vpack.c.b16 %v541, %v539
        %v578 = vpack.c.b16 %v542, %v540
        %v579 = vpack.c.b16 %v545, %v543
        %v580 = vpack.c.b16 %v546, %v544
        %v581 = vpack.c.b16 %v549, %v547
        %v582 = vpack.c.b16 %v550, %v548
        %615 = vmatpush.bf16.msra.mxu0 %v565
        %616 = vmatpush.bf16.msra.mxu0 %v563
        %617 = vmatpush.bf16.msra.mxu0 %v561
        %618 = vmatpush.bf16.msra.mxu0 %v559
        %619 = vmatpush.bf16.msra.mxu0 %v557
        %620 = vmatpush.bf16.msra.mxu0 %v555
        %621 = vmatpush.bf16.msra.mxu0 %v553
        %622 = vmatpush.bf16.msra.mxu0 %v551
        %623 = vmatmul.bf16.gmra.mxu0 %v414
        %v624 = vpop.f32.mrf.mxu0
        %v625 = vadd.f32 %v451, %v624
        %v626 = vpop.f32.mrf.mxu0
        %627 = vdwg.mxu0
        %628 = vmatpush.bf16.msra.mxu0 %v581
        %629 = vmatpush.bf16.msra.mxu0 %v579
        %630 = vmatpush.bf16.msra.mxu0 %v577
        %631 = vmatpush.bf16.msra.mxu0 %v575
        %632 = vmatpush.bf16.msra.mxu0 %v573
        %633 = vmatpush.bf16.msra.mxu0 %v571
        %634 = vmatpush.bf16.msra.mxu0 %v569
        %635 = vmatpush.bf16.msra.mxu0 %v567
        %636 = vmatmul.bf16.gmra.mxu0 %v415
        %v637 = vpop.f32.mrf.mxu0
        %v638 = vadd.f32 %v625, %v637
        %v639 = vpop.f32.mrf.mxu0
        %640 = vdwg.mxu0
        %641 = vmatpush.bf16.msra.mxu0 %v566
        %642 = vmatpush.bf16.msra.mxu0 %v564
        %643 = vmatpush.bf16.msra.mxu0 %v562
        %644 = vmatpush.bf16.msra.mxu0 %v560
        %645 = vmatpush.bf16.msra.mxu0 %v558
        %646 = vmatpush.bf16.msra.mxu0 %v556
        %647 = vmatpush.bf16.msra.mxu0 %v554
        %648 = vmatpush.bf16.msra.mxu0 %v552
        %649 = vmatmul.bf16.gmra.mxu0 %v414
        %v650 = vpop.f32.mrf.mxu0
        %v651 = vadd.f32 %v452, %v650
        %v652 = vpop.f32.mrf.mxu0
        %653 = vdwg.mxu0
        %654 = vmatpush.bf16.msra.mxu0 %v582
        %655 = vmatpush.bf16.msra.mxu0 %v580
        %656 = vmatpush.bf16.msra.mxu0 %v578
        %657 = vmatpush.bf16.msra.mxu0 %v576
        %658 = vmatpush.bf16.msra.mxu0 %v574
        %659 = vmatpush.bf16.msra.mxu0 %v572
        %660 = vmatpush.bf16.msra.mxu0 %v570
        %661 = vmatpush.bf16.msra.mxu0 %v568
        %662 = vmatmul.bf16.gmra.mxu0 %v415
        %v663 = vpop.f32.mrf.mxu0
        %v664 = vadd.f32 %v651, %v663
        %v665 = vpop.f32.mrf.mxu0
        %666 = vdwg.mxu0
        %v667 = vadd.f32 %v638, %v310
        %v668 = vadd.f32 %v664, %v323
        %v669 = vadd.f32 %v667, %v668
        %670 = vadd.xlane.f32.xlu0 %v669
        %v671 = vpop.xlane.xlu0 %670
        %v672 = vrcp.pop 256.0
        %v673 = vmul.f32 256.0, %v672
        %v674 = vsub.f32 1.0, %v673
        %v675 = vmul.f32 %v672, %v674
        %v676 = vadd.f32 %v672, %v675
        %vm677 = vweird.f32 %v672
        %v678 = vsel %vm677, %v672, %v676
        %v679 = vmul.f32 %v671, %v678
        %v680 = vsub.f32 %v667, %v679
        %v681 = vsub.f32 %v668, %v679
        %v682 = vmul.f32 %v680, %v680
        %v683 = vmul.f32 %v681, %v681
        %v684 = vadd.f32 %v682, %v683
        %685 = vadd.xlane.f32.xlu0 %v684
        %v686 = vpop.xlane.xlu0 %685
        %v687 = vmul.f32 %v686, %v678
        %v688 = vadd.f32 %v687, 1e-05
        %v689 = vrsqrt.pop %v688
        %v690 = vmul.f32 %v689, %v688
        %v691 = vmul.f32 %v690, %v689
        %v692 = vmul.f32 0.5, %v691
        %v693 = vsub.f32 1.5, %v692
        %v694 = vmul.f32 %v689, %v693
        %vm695 = vweird.f32 %v688
        %vm696 = vweird.f32 %v689
        %vm697 = vmor %vm695, %vm696
        %v698 = vsel %vm697, %v689, %v694
        %v699 = vmul.f32 %v680, %v698
        %v700 = vmul.f32 %v681, %v698
        %s701 = scalar_lea.vmem [#allocation8], 2
        %v702 = vld [vmem:[%s701] ss:$4 sm:$0x3]
        %v704 = vperm.slane %v702, 0
        %v705 = vperm.slane %v702, 1
        %v708 = vmul.f32 %v699, %v704
        %v709 = vmul.f32 %v700, %v705
        %s710 = scalar_lea.vmem [#allocation8], 3
        %v711 = vld [vmem:[%s710] ss:$4 sm:$0x3]
        %v713 = vperm.slane %v711, 0
        %v714 = vperm.slane %v711, 1
        %v717 = vadd.f32 %v708, %v713
        %v718 = vadd.f32 %v709, %v714
        %719 = vst [vmem:[%s262] sm:$0xff] %v717
        %720 = vst [vmem:[%s262 + $0x8] sm:$0xff] %v718
        %s721 = sand.u32 %s120, 1
        %s722 = scalar_lea.sflag [#allocation4], %s721
        %s723 = sand.u32 %s120, 1
        %s724 = smul.addr %s723, 16
        %s725 = scalar_lea.vmem [#allocation10], %s724
        // Predicated region
        $region53: #{tpu_custom_call.1} parent=35 // pred_check
          %p726 = pneg %p130
        $region54: #{tpu_custom_call.1} parent=35 // pred_check_branch
          %728 = sbr.rel (%p726) target = $region56
        $region55: #{tpu_custom_call.1} parent=35 // pred_region
          %730 = vsyncadd %s722, 0
          %s731 = smul.addr %s23, 2
          %s732 = smul.addr %s731, 8
          %s733 = scalar_lea.hbm %s4, %s732
          %s735 = sshll.u32 %s725, 4
          %s736 = int_to_ptr.vmem [resolvable:$true] %s735
          %s737 = sshll.u32 %s733, 4
          %s738 = int_to_ptr.hbm [resolvable:$true] %s737
          %740 = dma.vmem_to_hbm [thread:$0]  %s736, 256, %s738, %s722
        $region56: #{tpu_custom_call.1} parent=35 // pred_fallthru
          _
      $region36: #{tpu_custom_call.1} parent=5 // pred_fallthru
        _
      %p741 = scmp.le.s32.totalorder 2, %s18
      // Predicated region
      $region57: #{tpu_custom_call.1} parent=5 // pred_check
        %p742 = pneg %p741
      $region58: #{tpu_custom_call.1} parent=5 // pred_check_branch
        %744 = sbr.rel (%p742) target = $region60
      $region59: #{tpu_custom_call.1} parent=5 // pred_region
        %s745 = ssub.s32 %s18, 2
        // Predicated region
        $region61: #{tpu_custom_call.1} parent=59 // pred_check
          %p746 = pneg %p136
        $region62: #{tpu_custom_call.1} parent=59 // pred_check_branch
          %748 = sbr.rel (%p746) target = $region64
        $region63: #{tpu_custom_call.1} parent=59 // pred_region
          %s749 = sand.u32 %s121, 1
          %s750 = scalar_lea.sflag [#allocation4], %s749
          %s751 = sand.u32 %s121, 1
          %s752 = smul.addr %s751, 16
          %s753 = scalar_lea.vmem [#allocation10], %s752
          %755 = dma.done %s750, 256
        $region64: #{tpu_custom_call.1} parent=59 // pred_fallthru
          _
      $region60: #{tpu_custom_call.1} parent=5 // pred_fallthru
        _
    $region6: #{tpu_custom_call.1} parent=1 // loop_footer
      %s22 = sadd.s32 1, %s18
    $region7: #{tpu_custom_call.1} parent=1 // loop_footer_branch
      %17 = sbr.rel target = $region3
    $region8: #{tpu_custom_call.1} parent=1 // loop_exit
      _
    %756 = vsyncpa [#allocation3], 1
    %s757 = scalar_lea.sflag [#allocation3], 1
    %758 = vsyncpa %s757, 1
    %759 = vsyncpa [#allocation6], 1
    %760 = vsyncpa [#allocation9], 1
    %761 = vsyncpa [#allocation4], 1
    %s762 = scalar_lea.sflag [#allocation4], 1
    %763 = vsyncpa %s762, 1

</llo_original>
